<compile_context>
chip_gen: v7x
topology: tpu7x:2x2x1
jax: 0.10.0
libtpu: 0.0.40
codegen_flags: <defaults>
</compile_context>

<pallas_src>
import math

import jax
import jax.numpy as jnp
from jax.experimental import pallas as pl
from jax.experimental.pallas import tpu as pltpu


def _attention_block_kernel(
    x_ref,                      # (1, HW, C)  current batch element, channel-last, flattened
    gamma_ref, beta_ref,        # (1, C)      GroupNorm affine params
    gmat_ref, gmt_ref,          # (C, G), (G, C) one-hot group matrices (f32, exact)
    wqkv_ref, bqkv_ref,         # (C, 3C) bf16, (1, 3C) f32  packed q/k/v projection
    pw_ref, pb_ref,             # (C, C) bf16,  (1, C)  f32  output projection
    out_ref,                    # (1, TQ, C)  output tile (one block of query rows)
    xn_s, q_s, k_s, v_s,        # VMEM scratch, persistent across the inner q-tile axis
):
    qi = pl.program_id(1)
    _, HW, C = x_ref.shape
    TQ = out_ref.shape[1]
    G = gmat_ref.shape[1]
    cpg = C // G
    eps = 1e-5
    scale = float(C) ** -0.5

    # ---- once per image (first q-tile): GroupNorm + packed QKV into scratch ----
    @pl.when(qi == 0)
    def _prologue():
        xf = x_ref[0].astype(jnp.float32)                              # (HW, C)

        # GroupNorm stats: fuse sum(x) and sum(x^2) into ONE tiny (2,C)@(C,G) matmul.
        s1 = jnp.sum(xf, axis=0, keepdims=True)                        # (1, C)
        s2 = jnp.sum(xf * xf, axis=0, keepdims=True)                   # (1, C)
        g12 = jnp.dot(jnp.concatenate([s1, s2], axis=0), gmat_ref[...],
                      preferred_element_type=jnp.float32) / float(HW * cpg)   # (2, G)
        mean_g = g12[0:1, :]
        var_g = jnp.maximum(g12[1:2, :] - mean_g * mean_g, 0.0)        # clamp: no negative var
        rstd_g = jax.lax.rsqrt(var_g + eps)
        mr_c = jnp.dot(jnp.concatenate([mean_g, rstd_g], axis=0), gmt_ref[...],
                       preferred_element_type=jnp.float32)             # (2, C) broadcast back
        xn = (xf - mr_c[0:1, :]) * mr_c[1:2, :] * gamma_ref[...] + beta_ref[...]
        xn_s[...] = xn

        # Packed QKV: single (HW, C) @ (C, 3C) bf16 matmul, f32 accumulation.
        qkv = jnp.dot(xn.astype(jnp.bfloat16), wqkv_ref[...],
                      preferred_element_type=jnp.float32) + bqkv_ref[...]      # (HW, 3C)
        q_s[...] = (qkv[:, :C] * scale).astype(jnp.bfloat16)           # fold 1/sqrt(d) into q
        k_s[...] = qkv[:, C:2 * C].astype(jnp.bfloat16)
        v_s[...] = qkv[:, 2 * C:].astype(jnp.bfloat16)

    # ---- per q-tile attention ----
    row0 = pl.multiple_of(qi * TQ, TQ)
    q_t = q_s[pl.ds(row0, TQ), :]                                      # (TQ, C) bf16, pre-scaled

    # scores = q_t @ k^T : contract channel dim of both operands (NT matmul on the MXU).
    s = jax.lax.dot_general(q_t, k_s[...], (((1,), (1,)), ((), ())),
                            preferred_element_type=jnp.float32)        # (TQ, HW)

    m = jnp.max(s, axis=-1, keepdims=True)
    p = jnp.exp(s - m)
    l = jnp.sum(p, axis=-1, keepdims=True)
    h = jnp.dot(p.astype(jnp.bfloat16), v_s[...],
                preferred_element_type=jnp.float32)                    # (TQ, C)
    h = h * pl.reciprocal(l, approx=True)                              # normalize after p@v

    h = jnp.dot(h.astype(jnp.bfloat16), pw_ref[...],
                preferred_element_type=jnp.float32) + pb_ref[...]

    # Residual uses the NORMALIZED x (exactly as the PyTorch forward does).
    out_ref[0] = (xn_s[pl.ds(row0, TQ), :] + h).astype(out_ref.dtype)


def attention_block_pallas(x, params, num_groups=32, q_tile=128):
    """x: (B, C, H, W) NCHW like the PyTorch module. Returns (B, C, H, W)."""
    B, C, H, W = x.shape
    HW = H * W
    G = num_groups
    assert C % G == 0, "GroupNorm requires channels to be a multiple of num_groups"
    TQ = min(q_tile, HW)
    assert HW % TQ == 0 and TQ % 8 == 0

    # Channel-last, flattened spatial sequence (transposes live outside the kernel).
    x_seq = jnp.transpose(x, (0, 2, 3, 1)).reshape(B, HW, C)

    gamma = params["gamma"].reshape(1, C).astype(jnp.float32)
    beta = params["beta"].reshape(1, C).astype(jnp.float32)

    cpg = C // G
    gmat = (jnp.arange(C)[:, None] // cpg == jnp.arange(G)[None, :]).astype(jnp.float32)
    gmat_t = gmat.T

    # Pack q/k/v weights along N and pre-cast matmul weights to bf16 once in the wrapper.
    wqkv = jnp.concatenate([params["qw"], params["kw"], params["vw"]], axis=1
                           ).astype(jnp.bfloat16)                      # (C, 3C)
    bqkv = jnp.concatenate([params["qb"], params["kb"], params["vb"]], axis=0
                           ).reshape(1, 3 * C).astype(jnp.float32)
    pw = params["proj_w"].astype(jnp.bfloat16)
    pb = params["proj_b"].reshape(1, C).astype(jnp.float32)

    weights = [gamma, beta, gmat, gmat_t, wqkv, bqkv, pw, pb]

    def full_spec(a):
        nd = a.ndim
        return pl.BlockSpec(a.shape, lambda b, qi, _nd=nd: (0,) * _nd)

    in_specs = [pl.BlockSpec((1, HW, C), lambda b, qi: (b, 0, 0))] + \
               [full_spec(a) for a in weights]
    out_specs = pl.BlockSpec((1, TQ, C), lambda b, qi: (b, qi, 0))

    grid_spec = pltpu.PrefetchScalarGridSpec(
        num_scalar_prefetch=0,
        grid=(B, HW // TQ),
        in_specs=in_specs,
        out_specs=out_specs,
        scratch_shapes=[
            pltpu.VMEM((HW, C), jnp.float32),    # normalized x (residual + QKV source)
            pltpu.VMEM((HW, C), jnp.bfloat16),   # q (pre-scaled by d^-0.5)
            pltpu.VMEM((HW, C), jnp.bfloat16),   # k
            pltpu.VMEM((HW, C), jnp.bfloat16),   # v
        ],
    )

    out_seq = pl.pallas_call(
        _attention_block_kernel,
        out_shape=jax.ShapeDtypeStruct((B, HW, C), jnp.float32),
        grid_spec=grid_spec,
        compiler_params=pltpu.CompilerParams(
            dimension_semantics=("parallel", "arbitrary")),
    )(x_seq, *weights)

    return jnp.transpose(out_seq.reshape(B, H, W, C), (0, 3, 1, 2))


def init_params(key, d):
    # The PyTorch module uses unscaled randn weights; we use 1/sqrt(d)-scaled values so the
    # softmax stays smooth and the bf16-vs-f32 numerical comparison is meaningful.
    # Forward-pass semantics are unchanged (parameters are just data).
    ks = jax.random.split(key, 10)
    s = 1.0 / math.sqrt(d)

    def n(k, shape, sc):
        return sc * jax.random.normal(k, shape, jnp.float32)

    return dict(
        gamma=1.0 + 0.1 * jax.random.normal(ks[0], (d,), jnp.float32),
        beta=n(ks[1], (d,), 0.1),
        qw=n(ks[2], (d, d), s), qb=n(ks[3], (d,), 0.02),
        kw=n(ks[4], (d, d), s), kb=n(ks[5], (d,), 0.02),
        vw=n(ks[6], (d, d), s), vb=n(ks[7], (d,), 0.02),
        proj_w=n(ks[8], (d, d), s), proj_b=n(ks[9], (d,), 0.02),
    )


def attention_block_reference(x, params, num_groups=32, eps=1e-5):
    # Pure-JAX f32 reference mirroring the PyTorch forward exactly.
    B, C, H, W = x.shape
    xg = x.reshape(B, num_groups, C // num_groups, H, W)
    mean = xg.mean(axis=(2, 3, 4), keepdims=True)
    var = xg.var(axis=(2, 3, 4), keepdims=True)
    xn = ((xg - mean) / jnp.sqrt(var + eps)).reshape(B, C, H, W)
    xn = xn * params["gamma"].reshape(1, C, 1, 1) + params["beta"].reshape(1, C, 1, 1)
    xh = jnp.transpose(xn, (0, 2, 3, 1))                      # (B, H, W, C)
    q = xh @ params["qw"] + params["qb"]
    k = xh @ params["kw"] + params["kb"]
    v = xh @ params["vw"] + params["vb"]
    w = jnp.einsum("bhwc,bHWc->bhwHW", q, k) * (C ** -0.5)
    w = jax.nn.softmax(w.reshape(B, H, W, H * W), axis=-1).reshape(B, H, W, H, W)
    h = jnp.einsum("bhwHW,bHWc->bhwc", w, v)
    h = h @ params["proj_w"] + params["proj_b"]
    return jnp.transpose(xh + h, (0, 3, 1, 2))                # residual uses normalized x


if __name__ == "__main__":
    key = jax.random.PRNGKey(0)
    # GroupNorm(num_groups=32) requires channels % 32 == 0; d=128 keeps every vreg lane-dense.
    B, d, H, W = 2, 128, 16, 16
    kx, kp = jax.random.split(key)
    x = jax.random.normal(kx, (B, d, H, W), jnp.float32)      # NCHW, like the PyTorch module
    params = init_params(kp, d)

    out = attention_block_pallas(x, params)
    out = jax.block_until_ready(out)

    ref = attention_block_reference(x, params)
    err = float(jnp.max(jnp.abs(out - ref)))
    assert out.shape == (B, d, H, W)
    # bf16 matmul operands with f32 accumulation; tolerance sized accordingly.
    assert err < 1e-1, f"max abs error too large: {err}"
    print("KERNEL_OK")
</pallas_src>

<mosaic_0001>
module attributes {stable_mosaic.version = 11 : i64} {
  func.func @_attention_block_kernel(%arg0: i32, %arg1: i32, %arg2: memref<1x256x128xf32, #tpu.memory_space<vmem>>, %arg3: memref<1x128xf32, #tpu.memory_space<vmem>>, %arg4: memref<1x128xf32, #tpu.memory_space<vmem>>, %arg5: memref<128x32xf32, #tpu.memory_space<vmem>>, %arg6: memref<32x128xf32, #tpu.memory_space<vmem>>, %arg7: memref<128x384xbf16, #tpu.memory_space<vmem>>, %arg8: memref<1x384xf32, #tpu.memory_space<vmem>>, %arg9: memref<128x128xbf16, #tpu.memory_space<vmem>>, %arg10: memref<1x128xf32, #tpu.memory_space<vmem>>, %arg11: memref<1x128x128xf32, #tpu.memory_space<vmem>>, %arg12: memref<256x128xf32, #tpu.memory_space<vmem>>, %arg13: memref<256x128xbf16, #tpu.memory_space<vmem>>, %arg14: memref<256x128xbf16, #tpu.memory_space<vmem>>, %arg15: memref<256x128xbf16, #tpu.memory_space<vmem>>) attributes {dimension_semantics = [#tpu.dimension_semantics<parallel>, #tpu.dimension_semantics<arbitrary>], iteration_bounds = array<i64: 2, 2>, scalar_prefetch = 0 : i64, scratch_operands = 4 : i64, tpu.core_type = #tpu.core_type<tc>, window_params = [{transform_indices = @transform_0, window_bounds = array<i64: 1, 256, 128>}, {pipeline_mode = #tpu.pipeline_mode<synchronous>, transform_indices = @transform_1, window_bounds = array<i64: 1, 128>}, {pipeline_mode = #tpu.pipeline_mode<synchronous>, transform_indices = @transform_2, window_bounds = array<i64: 1, 128>}, {pipeline_mode = #tpu.pipeline_mode<synchronous>, transform_indices = @transform_3, window_bounds = array<i64: 128, 32>}, {pipeline_mode = #tpu.pipeline_mode<synchronous>, transform_indices = @transform_4, window_bounds = array<i64: 32, 128>}, {pipeline_mode = #tpu.pipeline_mode<synchronous>, transform_indices = @transform_5, window_bounds = array<i64: 128, 384>}, {pipeline_mode = #tpu.pipeline_mode<synchronous>, transform_indices = @transform_6, window_bounds = array<i64: 1, 384>}, {pipeline_mode = #tpu.pipeline_mode<synchronous>, transform_indices = @transform_7, window_bounds = array<i64: 128, 128>}, {pipeline_mode = #tpu.pipeline_mode<synchronous>, transform_indices = @transform_8, window_bounds = array<i64: 1, 128>}, {transform_indices = @transform_9, window_bounds = array<i64: 1, 128, 128>}]} {
    %c0_i32 = arith.constant 0 : i32
    %0 = arith.cmpi eq, %arg1, %c0_i32 : i32
    %1 = arith.extui %0 : i1 to i32
    %c0_i32_0 = arith.constant 0 : i32
    %2 = arith.cmpi ne, %1, %c0_i32_0 : i32
    scf.if %2 {
      %c0_17 = arith.constant 0 : index
      %c0_18 = arith.constant 0 : index
      %c0_19 = arith.constant 0 : index
      %34 = vector.load %arg2[%c0_17, %c0_18, %c0_19] : memref<1x256x128xf32, #tpu.memory_space<vmem>>, vector<1x256x128xf32>
      %35 = vector.shape_cast %34 : vector<1x256x128xf32> to vector<256x128xf32>
      %cst_20 = arith.constant dense<0.000000e+00> : vector<128xf32>
      %36 = vector.multi_reduction <add>, %35, %cst_20 [0] : vector<256x128xf32> to vector<128xf32>
      %37 = vector.shape_cast %36 : vector<128xf32> to vector<1x128xf32>
      %38 = arith.mulf %35, %35 : vector<256x128xf32>
      %cst_21 = arith.constant dense<0.000000e+00> : vector<128xf32>
      %39 = vector.multi_reduction <add>, %38, %cst_21 [0] : vector<256x128xf32> to vector<128xf32>
      %40 = vector.shape_cast %39 : vector<128xf32> to vector<1x128xf32>
      %41 = tpu.concatenate %37, %40 in 0 : vector<1x128xf32>, vector<1x128xf32> -> vector<2x128xf32>
      %c0_22 = arith.constant 0 : index
      %c0_23 = arith.constant 0 : index
      %42 = vector.load %arg5[%c0_22, %c0_23] : memref<128x32xf32, #tpu.memory_space<vmem>>, vector<128x32xf32>
      %cst_24 = arith.constant dense<0.000000e+00> : vector<2x32xf32>
      %43 = tpu.matmul %41, %42, %cst_24 {dimension_numbers = #tpu.dot_dimension_numbers<[1], [0], [0], [1], [0, 0, 1, 1], [], []>} : vector<2x128xf32>, vector<128x32xf32>, vector<2x32xf32> -> vector<2x32xf32>
      %cst_25 = arith.constant 1.024000e+03 : f32
      %44 = vector.broadcast %cst_25 : f32 to vector<2x32xf32>
      %45 = arith.divf %43, %44 : vector<2x32xf32>
      %46 = vector.extract_strided_slice %45 {offsets = [0, 0], sizes = [1, 32], strides = [1, 1]} : vector<2x32xf32> to vector<1x32xf32>
      %47 = vector.extract_strided_slice %45 {offsets = [1, 0], sizes = [1, 32], strides = [1, 1]} : vector<2x32xf32> to vector<1x32xf32>
      %48 = arith.mulf %46, %46 : vector<1x32xf32>
      %49 = arith.subf %47, %48 : vector<1x32xf32>
      %cst_26 = arith.constant 0.000000e+00 : f32
      %50 = vector.broadcast %cst_26 : f32 to vector<1x32xf32>
      %51 = arith.maximumf %49, %50 : vector<1x32xf32>
      %cst_27 = arith.constant 9.99999974E-6 : f32
      %52 = vector.broadcast %cst_27 : f32 to vector<1x32xf32>
      %53 = arith.addf %51, %52 : vector<1x32xf32>
      %54 = math.rsqrt %53 : vector<1x32xf32>
      %55 = tpu.concatenate %46, %54 in 0 : vector<1x32xf32>, vector<1x32xf32> -> vector<2x32xf32>
      %c0_28 = arith.constant 0 : index
      %c0_29 = arith.constant 0 : index
      %56 = vector.load %arg6[%c0_28, %c0_29] : memref<32x128xf32, #tpu.memory_space<vmem>>, vector<32x128xf32>
      %cst_30 = arith.constant dense<0.000000e+00> : vector<2x128xf32>
      %57 = tpu.matmul %55, %56, %cst_30 {dimension_numbers = #tpu.dot_dimension_numbers<[1], [0], [0], [1], [0, 0, 1, 1], [], []>} : vector<2x32xf32>, vector<32x128xf32>, vector<2x128xf32> -> vector<2x128xf32>
      %58 = vector.extract_strided_slice %57 {offsets = [0, 0], sizes = [1, 128], strides = [1, 1]} : vector<2x128xf32> to vector<1x128xf32>
      %59 = vector.broadcast %58 : vector<1x128xf32> to vector<256x128xf32>
      %60 = arith.subf %35, %59 : vector<256x128xf32>
      %61 = vector.extract_strided_slice %57 {offsets = [1, 0], sizes = [1, 128], strides = [1, 1]} : vector<2x128xf32> to vector<1x128xf32>
      %62 = vector.broadcast %61 : vector<1x128xf32> to vector<256x128xf32>
      %63 = arith.mulf %60, %62 : vector<256x128xf32>
      %c0_31 = arith.constant 0 : index
      %c0_32 = arith.constant 0 : index
      %64 = vector.load %arg3[%c0_31, %c0_32] : memref<1x128xf32, #tpu.memory_space<vmem>>, vector<1x128xf32>
      %65 = vector.broadcast %64 : vector<1x128xf32> to vector<256x128xf32>
      %66 = arith.mulf %63, %65 : vector<256x128xf32>
      %c0_33 = arith.constant 0 : index
      %c0_34 = arith.constant 0 : index
      %67 = vector.load %arg4[%c0_33, %c0_34] : memref<1x128xf32, #tpu.memory_space<vmem>>, vector<1x128xf32>
      %68 = vector.broadcast %67 : vector<1x128xf32> to vector<256x128xf32>
      %69 = arith.addf %66, %68 : vector<256x128xf32>
      %c0_35 = arith.constant 0 : index
      %c0_36 = arith.constant 0 : index
      %70 = vector.load %arg12[%c0_35, %c0_36] : memref<256x128xf32, #tpu.memory_space<vmem>>, vector<256x128xf32>
      tpu.vector_store %arg12[%c0_35, %c0_36], %69 {strides = array<i32>} : memref<256x128xf32, #tpu.memory_space<vmem>>, vector<256x128xf32>,
      %71 = arith.truncf %69 : vector<256x128xf32> to vector<256x128xbf16>
      %c0_37 = arith.constant 0 : index
      %c0_38 = arith.constant 0 : index
      %72 = vector.load %arg7[%c0_37, %c0_38] : memref<128x384xbf16, #tpu.memory_space<vmem>>, vector<128x384xbf16>
      %cst_39 = arith.constant dense<0.000000e+00> : vector<256x384xf32>
      %73 = tpu.matmul %71, %72, %cst_39 {dimension_numbers = #tpu.dot_dimension_numbers<[1], [0], [0], [1], [0, 0, 1, 1], [], []>} : vector<256x128xbf16>, vector<128x384xbf16>, vector<256x384xf32> -> vector<256x384xf32>
      %c0_40 = arith.constant 0 : index
      %c0_41 = arith.constant 0 : index
      %74 = vector.load %arg8[%c0_40, %c0_41] : memref<1x384xf32, #tpu.memory_space<vmem>>, vector<1x384xf32>
      %75 = vector.broadcast %74 : vector<1x384xf32> to vector<256x384xf32>
      %76 = arith.addf %73, %75 : vector<256x384xf32>
      %77 = vector.extract_strided_slice %76 {offsets = [0, 0], sizes = [256, 128], strides = [1, 1]} : vector<256x384xf32> to vector<256x128xf32>
      %cst_42 = arith.constant 0.0883883461 : f32
      %78 = vector.broadcast %cst_42 : f32 to vector<256x128xf32>
      %79 = arith.mulf %77, %78 : vector<256x128xf32>
      %80 = arith.truncf %79 : vector<256x128xf32> to vector<256x128xbf16>
      %c0_43 = arith.constant 0 : index
      %c0_44 = arith.constant 0 : index
      %81 = vector.load %arg13[%c0_43, %c0_44] : memref<256x128xbf16, #tpu.memory_space<vmem>>, vector<256x128xbf16>
      tpu.vector_store %arg13[%c0_43, %c0_44], %80 {strides = array<i32>} : memref<256x128xbf16, #tpu.memory_space<vmem>>, vector<256x128xbf16>,
      %82 = vector.extract_strided_slice %76 {offsets = [0, 128], sizes = [256, 128], strides = [1, 1]} : vector<256x384xf32> to vector<256x128xf32>
      %83 = arith.truncf %82 : vector<256x128xf32> to vector<256x128xbf16>
      %c0_45 = arith.constant 0 : index
      %c0_46 = arith.constant 0 : index
      %84 = vector.load %arg14[%c0_45, %c0_46] : memref<256x128xbf16, #tpu.memory_space<vmem>>, vector<256x128xbf16>
      tpu.vector_store %arg14[%c0_45, %c0_46], %83 {strides = array<i32>} : memref<256x128xbf16, #tpu.memory_space<vmem>>, vector<256x128xbf16>,
      %85 = vector.extract_strided_slice %76 {offsets = [0, 256], sizes = [256, 128], strides = [1, 1]} : vector<256x384xf32> to vector<256x128xf32>
      %86 = arith.truncf %85 : vector<256x128xf32> to vector<256x128xbf16>
      %c0_47 = arith.constant 0 : index
      %c0_48 = arith.constant 0 : index
      %87 = vector.load %arg15[%c0_47, %c0_48] : memref<256x128xbf16, #tpu.memory_space<vmem>>, vector<256x128xbf16>
      tpu.vector_store %arg15[%c0_47, %c0_48], %86 {strides = array<i32>} : memref<256x128xbf16, #tpu.memory_space<vmem>>, vector<256x128xbf16>,
    } else {
    }
    %c128_i32 = arith.constant 128 : i32
    %3 = arith.muli %arg1, %c128_i32 : i32
    %4 = tpu.assume_multiple %3, 128 : i32
    %5 = arith.index_cast %4 : i32 to index
    %c0 = arith.constant 0 : index
    %6 = vector.load %arg13[%5, %c0] : memref<256x128xbf16, #tpu.memory_space<vmem>>, vector<128x128xbf16>
    %c0_1 = arith.constant 0 : index
    %c0_2 = arith.constant 0 : index
    %7 = vector.load %arg14[%c0_1, %c0_2] : memref<256x128xbf16, #tpu.memory_space<vmem>>, vector<256x128xbf16>
    %cst = arith.constant dense<0.000000e+00> : vector<128x256xf32>
    %8 = tpu.matmul %6, %7, %cst {dimension_numbers = #tpu.dot_dimension_numbers<[1], [1], [0], [0], [0, 0, 1, 0], [], []>} : vector<128x128xbf16>, vector<256x128xbf16>, vector<128x256xf32> -> vector<128x256xf32>
    %cst_3 = arith.constant dense<0xFF800000> : vector<128xf32>
    %9 = vector.multi_reduction <maximumf>, %8, %cst_3 [1] : vector<128x256xf32> to vector<128xf32>
    %10 = vector.shape_cast %9 : vector<128xf32> to vector<128x1xf32>
    %11 = vector.broadcast %10 : vector<128x1xf32> to vector<128x256xf32>
    %12 = arith.subf %8, %11 : vector<128x256xf32>
    %13 = math.exp %12 : vector<128x256xf32>
    %cst_4 = arith.constant dense<0.000000e+00> : vector<128xf32>
    %14 = vector.multi_reduction <add>, %13, %cst_4 [1] : vector<128x256xf32> to vector<128xf32>
    %15 = vector.shape_cast %14 : vector<128xf32> to vector<128x1xf32>
    %16 = arith.truncf %13 : vector<128x256xf32> to vector<128x256xbf16>
    %c0_5 = arith.constant 0 : index
    %c0_6 = arith.constant 0 : index
    %17 = vector.load %arg15[%c0_5, %c0_6] : memref<256x128xbf16, #tpu.memory_space<vmem>>, vector<256x128xbf16>
    %cst_7 = arith.constant dense<0.000000e+00> : vector<128x128xf32>
    %18 = tpu.matmul %16, %17, %cst_7 {dimension_numbers = #tpu.dot_dimension_numbers<[1], [0], [0], [1], [0, 0, 1, 1], [], []>} : vector<128x256xbf16>, vector<256x128xbf16>, vector<128x128xf32> -> vector<128x128xf32>
    %19 = tpu.reciprocal %15 {approx = true} : vector<128x1xf32> -> vector<128x1xf32>
    %20 = vector.broadcast %19 : vector<128x1xf32> to vector<128x128xf32>
    %21 = arith.mulf %18, %20 : vector<128x128xf32>
    %22 = arith.truncf %21 : vector<128x128xf32> to vector<128x128xbf16>
    %c0_8 = arith.constant 0 : index
    %c0_9 = arith.constant 0 : index
    %23 = vector.load %arg9[%c0_8, %c0_9] : memref<128x128xbf16, #tpu.memory_space<vmem>>, vector<128x128xbf16>
    %cst_10 = arith.constant dense<0.000000e+00> : vector<128x128xf32>
    %24 = tpu.matmul %22, %23, %cst_10 {dimension_numbers = #tpu.dot_dimension_numbers<[1], [0], [0], [1], [0, 0, 1, 1], [], []>} : vector<128x128xbf16>, vector<128x128xbf16>, vector<128x128xf32> -> vector<128x128xf32>
    %c0_11 = arith.constant 0 : index
    %c0_12 = arith.constant 0 : index
    %25 = vector.load %arg10[%c0_11, %c0_12] : memref<1x128xf32, #tpu.memory_space<vmem>>, vector<1x128xf32>
    %26 = vector.broadcast %25 : vector<1x128xf32> to vector<128x128xf32>
    %27 = arith.addf %24, %26 : vector<128x128xf32>
    %28 = arith.index_cast %4 : i32 to index
    %c0_13 = arith.constant 0 : index
    %29 = vector.load %arg12[%28, %c0_13] : memref<256x128xf32, #tpu.memory_space<vmem>>, vector<128x128xf32>
    %30 = arith.addf %29, %27 : vector<128x128xf32>
    %c0_14 = arith.constant 0 : index
    %c0_15 = arith.constant 0 : index
    %c0_16 = arith.constant 0 : index
    %31 = vector.load %arg11[%c0_14, %c0_15, %c0_16] : memref<1x128x128xf32, #tpu.memory_space<vmem>>, vector<1x128x128xf32>
    %32 = vector.shape_cast %31 : vector<1x128x128xf32> to vector<128x128xf32>
    %33 = vector.shape_cast %30 : vector<128x128xf32> to vector<1x128x128xf32>
    tpu.vector_store %arg11[%c0_14, %c0_15, %c0_16], %33 {strides = array<i32>} : memref<1x128x128xf32, #tpu.memory_space<vmem>>, vector<1x128x128xf32>,
    return
  }
  func.func @transform_0(%arg0: i32, %arg1: i32) -> (i32, i32, i32) {
    %c0_i32 = arith.constant 0 : i32
    %c0_i32_0 = arith.constant 0 : i32
    %c0_i32_1 = arith.constant 0 : i32
    return %arg0, %c0_i32, %c0_i32_0 : i32, i32, i32
  }
  func.func @transform_1(%arg0: i32, %arg1: i32) -> (i32, i32) {
    %c0_i32 = arith.constant 0 : i32
    %c0_i32_0 = arith.constant 0 : i32
    %c0_i32_1 = arith.constant 0 : i32
    return %c0_i32, %c0_i32_0 : i32, i32
  }
  func.func @transform_2(%arg0: i32, %arg1: i32) -> (i32, i32) {
    %c0_i32 = arith.constant 0 : i32
    %c0_i32_0 = arith.constant 0 : i32
    %c0_i32_1 = arith.constant 0 : i32
    return %c0_i32, %c0_i32_0 : i32, i32
  }
  func.func @transform_3(%arg0: i32, %arg1: i32) -> (i32, i32) {
    %c0_i32 = arith.constant 0 : i32
    %c0_i32_0 = arith.constant 0 : i32
    %c0_i32_1 = arith.constant 0 : i32
    return %c0_i32, %c0_i32_0 : i32, i32
  }
  func.func @transform_4(%arg0: i32, %arg1: i32) -> (i32, i32) {
    %c0_i32 = arith.constant 0 : i32
    %c0_i32_0 = arith.constant 0 : i32
    %c0_i32_1 = arith.constant 0 : i32
    return %c0_i32, %c0_i32_0 : i32, i32
  }
  func.func @transform_5(%arg0: i32, %arg1: i32) -> (i32, i32) {
    %c0_i32 = arith.constant 0 : i32
    %c0_i32_0 = arith.constant 0 : i32
    %c0_i32_1 = arith.constant 0 : i32
    return %c0_i32, %c0_i32_0 : i32, i32
  }
  func.func @transform_6(%arg0: i32, %arg1: i32) -> (i32, i32) {
    %c0_i32 = arith.constant 0 : i32
    %c0_i32_0 = arith.constant 0 : i32
    %c0_i32_1 = arith.constant 0 : i32
    return %c0_i32, %c0_i32_0 : i32, i32
  }
  func.func @transform_7(%arg0: i32, %arg1: i32) -> (i32, i32) {
    %c0_i32 = arith.constant 0 : i32
    %c0_i32_0 = arith.constant 0 : i32
    %c0_i32_1 = arith.constant 0 : i32
    return %c0_i32, %c0_i32_0 : i32, i32
  }
  func.func @transform_8(%arg0: i32, %arg1: i32) -> (i32, i32) {
    %c0_i32 = arith.constant 0 : i32
    %c0_i32_0 = arith.constant 0 : i32
    %c0_i32_1 = arith.constant 0 : i32
    return %c0_i32, %c0_i32_0 : i32, i32
  }
  func.func @transform_9(%arg0: i32, %arg1: i32) -> (i32, i32, i32) {
    %c0_i32 = arith.constant 0 : i32
    %c0_i32_0 = arith.constant 0 : i32
    return %arg0, %arg1, %c0_i32 : i32, i32, i32
  }
}

</mosaic_0001>

<llo_original>
// kernel: tpu_custom_call.1
$region0: #{tpu_custom_call.1}
  #allocation0 [shape = 'u32[]', space=smem, size = 0x4, offset = 0x4, fixed_abs, tag = 'smem constant byte address 0x4 - core index']
  #allocation1 [shape = 'u32[144,128]{1,0:T(1,128)}', space=vmem, size = 0x12000, scoped, tag = 'internal scratch']
  #allocation2 [shape = 'f32[256,128]{1,0:T(8,128)}', space=vmem, size = 0x20000, scoped, tag = 'scratch operand']
  #allocation3 [shape = 'bf16[256,128]{1,0:T(16,128)(2,1)}', space=vmem, size = 0x10000, scoped, tag = 'scratch operand']
  #allocation4 [shape = 'bf16[256,128]{1,0:T(16,128)(2,1)}', space=vmem, size = 0x10000, scoped, tag = 'scratch operand']
  #allocation5 [shape = 'bf16[256,128]{1,0:T(16,128)(2,1)}', space=vmem, size = 0x10000, scoped, tag = 'scratch operand']
  %s0 = inlined_call_operand.hbm [shape: f32[2,256,128], index: 0, kind: input, shape index: {}]
  %s1 = inlined_call_operand.vmem [shape: f32[1,128], index: 1, kind: input, shape index: {}]
  %s2 = inlined_call_operand.vmem [shape: f32[1,128], index: 2, kind: input, shape index: {}]
  %s3 = inlined_call_operand.vmem [shape: f32[128,32], index: 3, kind: input, shape index: {}]
  %s4 = inlined_call_operand.vmem [shape: f32[32,128], index: 4, kind: input, shape index: {}]
  %s5 = inlined_call_operand.hbm [shape: bf16[128,384], index: 5, kind: input, shape index: {}]
  %s6 = inlined_call_operand.vmem [shape: f32[1,384], index: 6, kind: input, shape index: {}]
  %s7 = inlined_call_operand.vmem [shape: bf16[128,128], index: 7, kind: input, shape index: {}]
  %s8 = inlined_call_operand.vmem [shape: f32[1,128], index: 8, kind: input, shape index: {}]
  %s9 = inlined_call_operand.hbm [shape: f32[2,256,128], index: 9, kind: output, shape index: {}]
  %s10 = sld [smem:[#allocation0]]
  $region81: #{tpu_custom_call.1} parent=0
    _
  %s12 = ssub.s32 1, %s10
  %s13 = scalar_select 0, %s12, %s10
  $region1: #{tpu_custom_call.1} parent=0
    #allocation6 [shape = 'u8[262144]{0}', space=vmem, size = 0x40000, scoped, tag = 'input window, operand 0']
    #allocation7 [shape = 's32[2]{0}', space=sflag, size = 0x8, scoped, tag = 'scoped memory for tpu_custom_call.1']
    #allocation8 [shape = 's32[2]{0}', space=sflag, size = 0x8, scoped, tag = 'scoped memory for tpu_custom_call.1']
    #allocation9 [shape = 'u8[98304]{0}', space=vmem, size = 0x18000, scoped, tag = 'input window, operand 5, single buffered']
    #allocation10 [shape = 's32[1]{0}', space=sflag, size = 0x4, scoped, tag = 'scoped memory for tpu_custom_call.1']
    #allocation11 [shape = 'u8[131072]{0}', space=vmem, size = 0x20000, scoped, tag = 'output window, operand 0']
    %14 = vsyncpa [#allocation7], 0
    %s15 = scalar_lea.sflag [#allocation7], 1
    %16 = vsyncpa %s15, 0
    %17 = vsyncpa [#allocation10], 0
    %18 = vsyncpa [#allocation8], 0
    %s19 = scalar_lea.sflag [#allocation8], 1
    %20 = vsyncpa %s19, 0
    loop: start=0, step=1, limit=6
    $region2: #{tpu_custom_call.1} parent=1 // loop_pre_header
      _
    $region3: #{tpu_custom_call.1} parent=1 // loop_header
      %s22 = sphi 0, %s26
      %p23 = scmp.ge.s32.totalorder %s22, 6
      %s29 = sphi 0, %s41
      %s30 = sphi 0, %s37
      %s31 = sphi 0, %s29
      %s32 = sphi 0, %s30
      %s33 = sphi 0, %s31
      %s34 = sphi 0, %s32
      %s44 = sphi 0, %s46
      %s47 = sphi 0, %s44
      %s48 = sphi 0, %s47
      %s64 = sphi 0, %s48
      %s68 = sphi 0, %s68
      %s70 = sphi 0, %s68
      %s71 = sphi 0, %s70
      %s85 = sphi 0, %s71
      %s89 = sphi 0, %s89
      %s91 = sphi 0, %s89
      %s92 = sphi 0, %s91
      %s106 = sphi 0, %s92
      %s110 = sphi 0, %s110
      %s112 = sphi 0, %s110
      %s113 = sphi 0, %s112
      %s127 = sphi 0, %s113
      %s131 = sphi 0, %s131
      %s133 = sphi 0, %s131
      %s134 = sphi 0, %s133
      %s148 = sphi 0, %s134
      %s152 = sphi 0, %s152
      %s154 = sphi 0, %s152
      %s155 = sphi 0, %s154
      %s169 = sphi 0, %s155
      %s173 = sphi 0, %s173
      %s175 = sphi 0, %s173
      %s176 = sphi 0, %s175
      %s190 = sphi 0, %s176
      %s194 = sphi 0, %s194
      %s196 = sphi 0, %s194
      %s197 = sphi 0, %s196
      %s211 = sphi 0, %s197
      %s215 = sphi 0, %s215
      %s217 = sphi 0, %s215
      %s218 = sphi 0, %s217
      %s232 = sphi 0, %s218
      %s240 = sphi 0, %s242
      %s243 = sphi 0, %s240
      %s244 = sphi 0, %s243
      %s260 = sphi 0, %s244
    $region4: #{tpu_custom_call.1} parent=1 // loop_header_branch
      %25 = sbr.rel (%p23) target = $region8
    $region5: #{tpu_custom_call.1} parent=1 // loop_body
      %s27 = ssub.s32 %s22, 1
      %s28 = ssub.s32 %s22, 2
      %s35 = sadd.s32 1, %s30
      %p36 = scmp.ge.s32.totalorder %s35, 2
      %s37 = scalar_select %p36, 0, %s35
      %s38 = sadd.s32 1, %s29
      %s39 = scalar_select %p36, %s38, %s29
      %p40 = scmp.ge.s32.totalorder %s39, 2
      %s41 = scalar_select %p40, 0, %s39
      %s42 = ssub.s32 %s29, %s41
      %p43 = scmp.eq.s32.totalorder %s42, 0
      %s45 = sadd.s32 %s44, 1
      %s46 = scalar_select %p43, %s44, %s45
      %p49 = pneg %p43
      %p50 = scmp.eq.s32.totalorder %s22, 3
      %p51 = por %p49, %p50
      %p52 = scmp.ne.s32.totalorder %s44, %s47
      %p53 = scmp.eq.s32.totalorder %s22, 0
      %p54 = por %p52, %p53
      %p55 = scmp.ne.s32.totalorder %s44, %s47
      %p56 = scmp.eq.s32.totalorder %s27, 3
      %p57 = por %p55, %p56
      %p58 = scmp.ne.s32.totalorder %s47, %s48
      %p59 = scmp.eq.s32.totalorder %s27, 0
      %p60 = por %p58, %p59
      %p61 = scmp.ne.s32.totalorder %s47, %s48
      %p62 = scmp.eq.s32.totalorder %s28, 3
      %p63 = por %p61, %p62
      %p65 = scmp.ne.s32.totalorder %s48, %s64
      %p66 = scmp.eq.s32.totalorder %s28, 0
      %p67 = por %p65, %p66
      %s69 = sadd.s32 %s68, 1
      %p72 = scmp.eq.s32.totalorder %s22, 3
      %p73 = scmp.ne.s32.totalorder %s68, %s70
      %p74 = scmp.eq.s32.totalorder %s22, 0
      %p75 = por %p73, %p74
      %p76 = scmp.ne.s32.totalorder %s68, %s70
      %p77 = scmp.eq.s32.totalorder %s27, 3
      %p78 = por %p76, %p77
      %p79 = scmp.ne.s32.totalorder %s70, %s71
      %p80 = scmp.eq.s32.totalorder %s27, 0
      %p81 = por %p79, %p80
      %p82 = scmp.ne.s32.totalorder %s70, %s71
      %p83 = scmp.eq.s32.totalorder %s28, 3
      %p84 = por %p82, %p83
      %p86 = scmp.ne.s32.totalorder %s71, %s85
      %p87 = scmp.eq.s32.totalorder %s28, 0
      %p88 = por %p86, %p87
      %s90 = sadd.s32 %s89, 1
      %p93 = scmp.eq.s32.totalorder %s22, 3
      %p94 = scmp.ne.s32.totalorder %s89, %s91
      %p95 = scmp.eq.s32.totalorder %s22, 0
      %p96 = por %p94, %p95
      %p97 = scmp.ne.s32.totalorder %s89, %s91
      %p98 = scmp.eq.s32.totalorder %s27, 3
      %p99 = por %p97, %p98
      %p100 = scmp.ne.s32.totalorder %s91, %s92
      %p101 = scmp.eq.s32.totalorder %s27, 0
      %p102 = por %p100, %p101
      %p103 = scmp.ne.s32.totalorder %s91, %s92
      %p104 = scmp.eq.s32.totalorder %s28, 3
      %p105 = por %p103, %p104
      %p107 = scmp.ne.s32.totalorder %s92, %s106
      %p108 = scmp.eq.s32.totalorder %s28, 0
      %p109 = por %p107, %p108
      %s111 = sadd.s32 %s110, 1
      %p114 = scmp.eq.s32.totalorder %s22, 3
      %p115 = scmp.ne.s32.totalorder %s110, %s112
      %p116 = scmp.eq.s32.totalorder %s22, 0
      %p117 = por %p115, %p116
      %p118 = scmp.ne.s32.totalorder %s110, %s112
      %p119 = scmp.eq.s32.totalorder %s27, 3
      %p120 = por %p118, %p119
      %p121 = scmp.ne.s32.totalorder %s112, %s113
      %p122 = scmp.eq.s32.totalorder %s27, 0
      %p123 = por %p121, %p122
      %p124 = scmp.ne.s32.totalorder %s112, %s113
      %p125 = scmp.eq.s32.totalorder %s28, 3
      %p126 = por %p124, %p125
      %p128 = scmp.ne.s32.totalorder %s113, %s127
      %p129 = scmp.eq.s32.totalorder %s28, 0
      %p130 = por %p128, %p129
      %s132 = sadd.s32 %s131, 1
      %p135 = scmp.eq.s32.totalorder %s22, 3
      %p136 = scmp.ne.s32.totalorder %s131, %s133
      %p137 = scmp.eq.s32.totalorder %s22, 0
      %p138 = por %p136, %p137
      %p139 = scmp.ne.s32.totalorder %s131, %s133
      %p140 = scmp.eq.s32.totalorder %s27, 3
      %p141 = por %p139, %p140
      %p142 = scmp.ne.s32.totalorder %s133, %s134
      %p143 = scmp.eq.s32.totalorder %s27, 0
      %p144 = por %p142, %p143
      %p145 = scmp.ne.s32.totalorder %s133, %s134
      %p146 = scmp.eq.s32.totalorder %s28, 3
      %p147 = por %p145, %p146
      %p149 = scmp.ne.s32.totalorder %s134, %s148
      %p150 = scmp.eq.s32.totalorder %s28, 0
      %p151 = por %p149, %p150
      %s153 = sadd.s32 %s152, 1
      %p156 = scmp.eq.s32.totalorder %s22, 3
      %p157 = scmp.ne.s32.totalorder %s152, %s154
      %p158 = scmp.eq.s32.totalorder %s22, 0
      %p159 = por %p157, %p158
      %p160 = scmp.ne.s32.totalorder %s152, %s154
      %p161 = scmp.eq.s32.totalorder %s27, 3
      %p162 = por %p160, %p161
      %p163 = scmp.ne.s32.totalorder %s154, %s155
      %p164 = scmp.eq.s32.totalorder %s27, 0
      %p165 = por %p163, %p164
      %p166 = scmp.ne.s32.totalorder %s154, %s155
      %p167 = scmp.eq.s32.totalorder %s28, 3
      %p168 = por %p166, %p167
      %p170 = scmp.ne.s32.totalorder %s155, %s169
      %p171 = scmp.eq.s32.totalorder %s28, 0
      %p172 = por %p170, %p171
      %s174 = sadd.s32 %s173, 1
      %p177 = scmp.eq.s32.totalorder %s22, 3
      %p178 = scmp.ne.s32.totalorder %s173, %s175
      %p179 = scmp.eq.s32.totalorder %s22, 0
      %p180 = por %p178, %p179
      %p181 = scmp.ne.s32.totalorder %s173, %s175
      %p182 = scmp.eq.s32.totalorder %s27, 3
      %p183 = por %p181, %p182
      %p184 = scmp.ne.s32.totalorder %s175, %s176
      %p185 = scmp.eq.s32.totalorder %s27, 0
      %p186 = por %p184, %p185
      %p187 = scmp.ne.s32.totalorder %s175, %s176
      %p188 = scmp.eq.s32.totalorder %s28, 3
      %p189 = por %p187, %p188
      %p191 = scmp.ne.s32.totalorder %s176, %s190
      %p192 = scmp.eq.s32.totalorder %s28, 0
      %p193 = por %p191, %p192
      %s195 = sadd.s32 %s194, 1
      %p198 = scmp.eq.s32.totalorder %s22, 3
      %p199 = scmp.ne.s32.totalorder %s194, %s196
      %p200 = scmp.eq.s32.totalorder %s22, 0
      %p201 = por %p199, %p200
      %p202 = scmp.ne.s32.totalorder %s194, %s196
      %p203 = scmp.eq.s32.totalorder %s27, 3
      %p204 = por %p202, %p203
      %p205 = scmp.ne.s32.totalorder %s196, %s197
      %p206 = scmp.eq.s32.totalorder %s27, 0
      %p207 = por %p205, %p206
      %p208 = scmp.ne.s32.totalorder %s196, %s197
      %p209 = scmp.eq.s32.totalorder %s28, 3
      %p210 = por %p208, %p209
      %p212 = scmp.ne.s32.totalorder %s197, %s211
      %p213 = scmp.eq.s32.totalorder %s28, 0
      %p214 = por %p212, %p213
      %s216 = sadd.s32 %s215, 1
      %p219 = scmp.eq.s32.totalorder %s22, 3
      %p220 = scmp.ne.s32.totalorder %s215, %s217
      %p221 = scmp.eq.s32.totalorder %s22, 0
      %p222 = por %p220, %p221
      %p223 = scmp.ne.s32.totalorder %s215, %s217
      %p224 = scmp.eq.s32.totalorder %s27, 3
      %p225 = por %p223, %p224
      %p226 = scmp.ne.s32.totalorder %s217, %s218
      %p227 = scmp.eq.s32.totalorder %s27, 0
      %p228 = por %p226, %p227
      %p229 = scmp.ne.s32.totalorder %s217, %s218
      %p230 = scmp.eq.s32.totalorder %s28, 3
      %p231 = por %p229, %p230
      %p233 = scmp.ne.s32.totalorder %s218, %s232
      %p234 = scmp.eq.s32.totalorder %s28, 0
      %p235 = por %p233, %p234
      %s236 = ssub.s32 %s29, %s41
      %s237 = ssub.s32 %s30, %s37
      %s238 = sor.u32 %s236, %s237
      %p239 = scmp.eq.s32.totalorder %s238, 0
      %s241 = sadd.s32 %s240, 1
      %s242 = scalar_select %p239, %s240, %s241
      %p245 = pneg %p239
      %p246 = scmp.eq.s32.totalorder %s22, 3
      %p247 = por %p245, %p246
      %p248 = scmp.ne.s32.totalorder %s240, %s243
      %p249 = scmp.eq.s32.totalorder %s22, 0
      %p250 = por %p248, %p249
      %p251 = scmp.ne.s32.totalorder %s240, %s243
      %p252 = scmp.eq.s32.totalorder %s27, 3
      %p253 = por %p251, %p252
      %p254 = scmp.ne.s32.totalorder %s243, %s244
      %p255 = scmp.eq.s32.totalorder %s27, 0
      %p256 = por %p254, %p255
      %p257 = scmp.ne.s32.totalorder %s243, %s244
      %p258 = scmp.eq.s32.totalorder %s28, 3
      %p259 = por %p257, %p258
      %p261 = scmp.ne.s32.totalorder %s244, %s260
      %p262 = scmp.eq.s32.totalorder %s28, 0
      %p263 = por %p261, %p262
      %p264 = scmp.le.s32.totalorder 1, %s22
      %p265 = scmp.lt.s32.totalorder %s22, 5
      %p266 = pnand %p264, %p265
      %p267 = pneg %p266
      // Predicated region
      $region9: #{tpu_custom_call.1} parent=5 // pred_check
        _
      $region10: #{tpu_custom_call.1} parent=5 // pred_check_branch
        %269 = sbr.rel (%p266) target = $region12
      $region11: #{tpu_custom_call.1} parent=5 // pred_region
        %s270 = ssub.s32 %s22, 1
        // Predicated region
        $region13: #{tpu_custom_call.1} parent=11 // pred_check
          %p271 = pneg %p81
        $region14: #{tpu_custom_call.1} parent=11 // pred_check_branch
          %273 = sbr.rel (%p271) target = $region16
        $region15: #{tpu_custom_call.1} parent=11 // pred_region
          _
        $region16: #{tpu_custom_call.1} parent=11 // pred_fallthru
          _
        // Predicated region
        $region17: #{tpu_custom_call.1} parent=11 // pred_check
          %p274 = pneg %p102
        $region18: #{tpu_custom_call.1} parent=11 // pred_check_branch
          %276 = sbr.rel (%p274) target = $region20
        $region19: #{tpu_custom_call.1} parent=11 // pred_region
          _
        $region20: #{tpu_custom_call.1} parent=11 // pred_fallthru
          _
        // Predicated region
        $region21: #{tpu_custom_call.1} parent=11 // pred_check
          %p277 = pneg %p123
        $region22: #{tpu_custom_call.1} parent=11 // pred_check_branch
          %279 = sbr.rel (%p277) target = $region24
        $region23: #{tpu_custom_call.1} parent=11 // pred_region
          _
        $region24: #{tpu_custom_call.1} parent=11 // pred_fallthru
          _
        // Predicated region
        $region25: #{tpu_custom_call.1} parent=11 // pred_check
          %p280 = pneg %p144
        $region26: #{tpu_custom_call.1} parent=11 // pred_check_branch
          %282 = sbr.rel (%p280) target = $region28
        $region27: #{tpu_custom_call.1} parent=11 // pred_region
          _
        $region28: #{tpu_custom_call.1} parent=11 // pred_fallthru
          _
        // Predicated region
        $region29: #{tpu_custom_call.1} parent=11 // pred_check
          %p283 = pneg %p165
        $region30: #{tpu_custom_call.1} parent=11 // pred_check_branch
          %285 = sbr.rel (%p283) target = $region32
        $region31: #{tpu_custom_call.1} parent=11 // pred_region
          %s287 = ssub.s32 3072, 3072
          %288 = vsyncadd [#allocation10], %s287
          %s289 = sshll.u32 [#allocation9], 4
          %s290 = int_to_ptr.vmem [resolvable:$true] %s289
          %295 = dma.hbm_to_vmem [thread:$0]  %s5, 3072, %s290, [#allocation10], 192, 192, 12
        $region32: #{tpu_custom_call.1} parent=11 // pred_fallthru
          _
        // Predicated region
        $region33: #{tpu_custom_call.1} parent=11 // pred_check
          %p296 = pneg %p186
        $region34: #{tpu_custom_call.1} parent=11 // pred_check_branch
          %298 = sbr.rel (%p296) target = $region36
        $region35: #{tpu_custom_call.1} parent=11 // pred_region
          _
        $region36: #{tpu_custom_call.1} parent=11 // pred_fallthru
          _
        // Predicated region
        $region37: #{tpu_custom_call.1} parent=11 // pred_check
          %p299 = pneg %p207
        $region38: #{tpu_custom_call.1} parent=11 // pred_check_branch
          %301 = sbr.rel (%p299) target = $region40
        $region39: #{tpu_custom_call.1} parent=11 // pred_region
          _
        $region40: #{tpu_custom_call.1} parent=11 // pred_fallthru
          _
        // Predicated region
        $region41: #{tpu_custom_call.1} parent=11 // pred_check
          %p302 = pneg %p228
        $region42: #{tpu_custom_call.1} parent=11 // pred_check_branch
          %304 = sbr.rel (%p302) target = $region44
        $region43: #{tpu_custom_call.1} parent=11 // pred_region
          _
        $region44: #{tpu_custom_call.1} parent=11 // pred_fallthru
          _
      $region12: #{tpu_custom_call.1} parent=5 // pred_fallthru
        _
      %p305 = scmp.lt.s32.totalorder %s22, 4
      // Predicated region
      $region45: #{tpu_custom_call.1} parent=5 // pred_check
        %p306 = pneg %p305
      $region46: #{tpu_custom_call.1} parent=5 // pred_check_branch
        %308 = sbr.rel (%p306) target = $region48
      $region47: #{tpu_custom_call.1} parent=5 // pred_region
        // Predicated region
        $region49: #{tpu_custom_call.1} parent=47 // pred_check
          %p309 = pneg %p54
        $region50: #{tpu_custom_call.1} parent=47 // pred_check_branch
          %311 = sbr.rel (%p309) target = $region52
        $region51: #{tpu_custom_call.1} parent=47 // pred_region
          %s312 = sand.u32 %s44, 1
          %s313 = scalar_lea.sflag [#allocation7], %s312
          %s314 = sand.u32 %s44, 1
          %s315 = smul.addr %s314, 256
          %s316 = scalar_lea.vmem [#allocation6], %s315
          %s318 = ssub.s32 4096, 4096
          %319 = vsyncadd %s313, %s318
          %s320 = smul.addr %s29, 32
          %s321 = smul.addr %s320, 128
          %s322 = scalar_lea.hbm %s0, %s321
          %s323 = sshll.u32 %s316, 4
          %s324 = int_to_ptr.vmem [resolvable:$true] %s323
          %329 = dma.hbm_to_vmem [thread:$0]  %s322, 4096, %s324, %s313, 128, 128, 8
        $region52: #{tpu_custom_call.1} parent=47 // pred_fallthru
          _
      $region48: #{tpu_custom_call.1} parent=5 // pred_fallthru
        _
      %p330 = scmp.le.s32.totalorder 1, %s22
      %p331 = scmp.lt.s32.totalorder %s22, 5
      %p332 = pnand %p330, %p331
      %p333 = pneg %p332
      // Predicated region
      $region53: #{tpu_custom_call.1} parent=5 // pred_check
        _
      $region54: #{tpu_custom_call.1} parent=5 // pred_check_branch
        %335 = sbr.rel (%p332) target = $region56
      $region55: #{tpu_custom_call.1} parent=5 // pred_region
        %s336 = ssub.s32 %s22, 1
        %s337 = sand.u32 %s47, 1
        %s338 = scalar_lea.sflag [#allocation7], %s337
        %s339 = sand.u32 %s47, 1
        %s340 = smul.addr %s339, 256
        %s341 = scalar_lea.vmem [#allocation6], %s340
        // Predicated region
        $region57: #{tpu_custom_call.1} parent=55 // pred_check
          %p342 = pneg %p60
        $region58: #{tpu_custom_call.1} parent=55 // pred_check_branch
          %344 = sbr.rel (%p342) target = $region60
        $region59: #{tpu_custom_call.1} parent=55 // pred_region
          %345 = dma.done %s338, 4096
        $region60: #{tpu_custom_call.1} parent=55 // pred_fallthru
          _
        // Predicated region
        $region61: #{tpu_custom_call.1} parent=55 // pred_check
          %p346 = pneg %p165
        $region62: #{tpu_custom_call.1} parent=55 // pred_check_branch
          %348 = sbr.rel (%p346) target = $region64
        $region63: #{tpu_custom_call.1} parent=55 // pred_region
          %349 = dma.done [#allocation10], 3072
        $region64: #{tpu_custom_call.1} parent=55 // pred_fallthru
          _
        %s350 = sand.u32 %s47, 1
        %s351 = scalar_lea.sflag [#allocation7], %s350
        %s352 = sand.u32 %s47, 1
        %s353 = smul.addr %s352, 256
        %s354 = scalar_lea.vmem [#allocation6], %s353
        %p355 = pneg %p60
        %p356 = pneg %p57
        %p357 = pneg %p81
        %p358 = pneg %p78
        %p359 = pneg %p102
        %p360 = pneg %p99
        %p361 = pneg %p123
        %p362 = pneg %p120
        %p363 = pneg %p144
        %p364 = pneg %p141
        %p365 = pneg %p165
        %p366 = pneg %p162
        %p367 = pneg %p186
        %p368 = pneg %p183
        %p369 = pneg %p207
        %p370 = pneg %p204
        %p371 = pneg %p228
        %p372 = pneg %p225
        %p373 = pneg %p256
        %p374 = pneg %p253
        %s375 = sand.u32 %s243, 1
        %s376 = scalar_lea.sflag [#allocation8], %s375
        %s377 = sand.u32 %s243, 1
        %s378 = smul.addr %s377, 128
        %s379 = scalar_lea.vmem [#allocation11], %s378
        %s380 = smul.u32 16, %s32
        %p382 = scmp.eq.s32.totalorder %s32, 0
        // Predicated region
        $region65: #{tpu_custom_call.1} parent=55 // pred_check
          %p383 = pneg %p382
        $region66: #{tpu_custom_call.1} parent=55 // pred_check_branch
          %385 = sbr.rel (%p383) target = $region68
        $region67: #{tpu_custom_call.1} parent=55 // pred_region
          %v386 = vld [vmem:[%s341] sm:$0xff]
          %v387 = vld [vmem:[%s341 + $0x8] sm:$0xff]
          %v388 = vld [vmem:[%s341 + $0x10] sm:$0xff]
          %v389 = vld [vmem:[%s341 + $0x18] sm:$0xff]
          %v390 = vld [vmem:[%s341 + $0x20] sm:$0xff]
          %v391 = vld [vmem:[%s341 + $0x28] sm:$0xff]
          %v392 = vld [vmem:[%s341 + $0x30] sm:$0xff]
          %v393 = vld [vmem:[%s341 + $0x38] sm:$0xff]
          %v394 = vld [vmem:[%s341 + $0x40] sm:$0xff]
          %v395 = vld [vmem:[%s341 + $0x48] sm:$0xff]
          %v396 = vld [vmem:[%s341 + $0x50] sm:$0xff]
          %v397 = vld [vmem:[%s341 + $0x58] sm:$0xff]
          %v398 = vld [vmem:[%s341 + $0x60] sm:$0xff]
          %v399 = vld [vmem:[%s341 + $0x68] sm:$0xff]
          %v400 = vld [vmem:[%s341 + $0x70] sm:$0xff]
          %v401 = vld [vmem:[%s341 + $0x78] sm:$0xff]
          %v402 = vld [vmem:[%s341 + $0x80] sm:$0xff]
          %v403 = vld [vmem:[%s341 + $0x88] sm:$0xff]
          %v404 = vld [vmem:[%s341 + $0x90] sm:$0xff]
          %v405 = vld [vmem:[%s341 + $0x98] sm:$0xff]
          %v406 = vld [vmem:[%s341 + $0xa0] sm:$0xff]
          %v407 = vld [vmem:[%s341 + $0xa8] sm:$0xff]
          %v408 = vld [vmem:[%s341 + $0xb0] sm:$0xff]
          %v409 = vld [vmem:[%s341 + $0xb8] sm:$0xff]
          %v410 = vld [vmem:[%s341 + $0xc0] sm:$0xff]
          %v411 = vld [vmem:[%s341 + $0xc8] sm:$0xff]
          %v412 = vld [vmem:[%s341 + $0xd0] sm:$0xff]
          %v413 = vld [vmem:[%s341 + $0xd8] sm:$0xff]
          %v414 = vld [vmem:[%s341 + $0xe0] sm:$0xff]
          %v415 = vld [vmem:[%s341 + $0xe8] sm:$0xff]
          %v416 = vld [vmem:[%s341 + $0xf0] sm:$0xff]
          %v417 = vld [vmem:[%s341 + $0xf8] sm:$0xff]
          %v418 = vadd.f32 %v386, %v387
          %v419 = vadd.f32 %v418, %v388
          %v420 = vadd.f32 %v419, %v389
          %v421 = vadd.f32 %v420, %v390
          %v422 = vadd.f32 %v421, %v391
          %v423 = vadd.f32 %v422, %v392
          %v424 = vadd.f32 %v423, %v393
          %v425 = vadd.f32 %v424, %v394
          %v426 = vadd.f32 %v425, %v395
          %v427 = vadd.f32 %v426, %v396
          %v428 = vadd.f32 %v427, %v397
          %v429 = vadd.f32 %v428, %v398
          %v430 = vadd.f32 %v429, %v399
          %v431 = vadd.f32 %v430, %v400
          %v432 = vadd.f32 %v431, %v401
          %v433 = vadd.f32 %v432, %v402
          %v434 = vadd.f32 %v433, %v403
          %v435 = vadd.f32 %v434, %v404
          %v436 = vadd.f32 %v435, %v405
          %v437 = vadd.f32 %v436, %v406
          %v438 = vadd.f32 %v437, %v407
          %v439 = vadd.f32 %v438, %v408
          %v440 = vadd.f32 %v439, %v409
          %v441 = vadd.f32 %v440, %v410
          %v442 = vadd.f32 %v441, %v411
          %v443 = vadd.f32 %v442, %v412
          %v444 = vadd.f32 %v443, %v413
          %v445 = vadd.f32 %v444, %v414
          %v446 = vadd.f32 %v445, %v415
          %v447 = vadd.f32 %v446, %v416
          %v448 = vadd.f32 %v447, %v417
          %v449 = vrot.slane %v448, 4
          %v450 = vadd.f32 %v448, %v449
          %v451 = vrot.slane %v450, 2
          %v452 = vadd.f32 %v450, %v451
          %v453 = vrot.slane %v452, 1
          %v454 = vadd.f32 %v452, %v453
          %v455 = vmul.f32 %v386, %v386
          %v456 = vmul.f32 %v387, %v387
          %v457 = vmul.f32 %v388, %v388
          %v458 = vmul.f32 %v389, %v389
          %v459 = vmul.f32 %v390, %v390
          %v460 = vmul.f32 %v391, %v391
          %v461 = vmul.f32 %v392, %v392
          %v462 = vmul.f32 %v393, %v393
          %v463 = vmul.f32 %v394, %v394
          %v464 = vmul.f32 %v395, %v395
          %v465 = vmul.f32 %v396, %v396
          %v466 = vmul.f32 %v397, %v397
          %v467 = vmul.f32 %v398, %v398
          %v468 = vmul.f32 %v399, %v399
          %v469 = vmul.f32 %v400, %v400
          %v470 = vmul.f32 %v401, %v401
          %v471 = vmul.f32 %v402, %v402
          %v472 = vmul.f32 %v403, %v403
          %v473 = vmul.f32 %v404, %v404
          %v474 = vmul.f32 %v405, %v405
          %v475 = vmul.f32 %v406, %v406
          %v476 = vmul.f32 %v407, %v407
          %v477 = vmul.f32 %v408, %v408
          %v478 = vmul.f32 %v409, %v409
          %v479 = vmul.f32 %v410, %v410
          %v480 = vmul.f32 %v411, %v411
          %v481 = vmul.f32 %v412, %v412
          %v482 = vmul.f32 %v413, %v413
          %v483 = vmul.f32 %v414, %v414
          %v484 = vmul.f32 %v415, %v415
          %v485 = vmul.f32 %v416, %v416
          %v486 = vmul.f32 %v417, %v417
          %v487 = vadd.f32 %v455, %v456
          %v488 = vadd.f32 %v487, %v457
          %v489 = vadd.f32 %v488, %v458
          %v490 = vadd.f32 %v489, %v459
          %v491 = vadd.f32 %v490, %v460
          %v492 = vadd.f32 %v491, %v461
          %v493 = vadd.f32 %v492, %v462
          %v494 = vadd.f32 %v493, %v463
          %v495 = vadd.f32 %v494, %v464
          %v496 = vadd.f32 %v495, %v465
          %v497 = vadd.f32 %v496, %v466
          %v498 = vadd.f32 %v497, %v467
          %v499 = vadd.f32 %v498, %v468
          %v500 = vadd.f32 %v499, %v469
          %v501 = vadd.f32 %v500, %v470
          %v502 = vadd.f32 %v501, %v471
          %v503 = vadd.f32 %v502, %v472
          %v504 = vadd.f32 %v503, %v473
          %v505 = vadd.f32 %v504, %v474
          %v506 = vadd.f32 %v505, %v475
          %v507 = vadd.f32 %v506, %v476
          %v508 = vadd.f32 %v507, %v477
          %v509 = vadd.f32 %v508, %v478
          %v510 = vadd.f32 %v509, %v479
          %v511 = vadd.f32 %v510, %v480
          %v512 = vadd.f32 %v511, %v481
          %v513 = vadd.f32 %v512, %v482
          %v514 = vadd.f32 %v513, %v483
          %v515 = vadd.f32 %v514, %v484
          %v516 = vadd.f32 %v515, %v485
          %v517 = vadd.f32 %v516, %v486
          %v518 = vrot.slane %v517, 4
          %v519 = vadd.f32 %v517, %v518
          %v520 = vrot.slane %v519, 2
          %v521 = vadd.f32 %v519, %v520
          %v522 = vrot.slane %v521, 1
          %v523 = vadd.f32 %v521, %v522
          %vm524 = vcmask 1040384
          %v525 = vsel %vm524, %v454, %v523
          %v526 = vld [vmem:[%s3] sm:$0xff]
          %v527 = vld [vmem:[%s3 + $0x8] sm:$0xff]
          %v528 = vld [vmem:[%s3 + $0x10] sm:$0xff]
          %v529 = vld [vmem:[%s3 + $0x18] sm:$0xff]
          %v530 = vld [vmem:[%s3 + $0x20] sm:$0xff]
          %v531 = vld [vmem:[%s3 + $0x28] sm:$0xff]
          %v532 = vld [vmem:[%s3 + $0x30] sm:$0xff]
          %v533 = vld [vmem:[%s3 + $0x38] sm:$0xff]
          %v534 = vld [vmem:[%s3 + $0x40] sm:$0xff]
          %v535 = vld [vmem:[%s3 + $0x48] sm:$0xff]
          %v536 = vld [vmem:[%s3 + $0x50] sm:$0xff]
          %v537 = vld [vmem:[%s3 + $0x58] sm:$0xff]
          %v538 = vld [vmem:[%s3 + $0x60] sm:$0xff]
          %v539 = vld [vmem:[%s3 + $0x68] sm:$0xff]
          %v540 = vld [vmem:[%s3 + $0x70] sm:$0xff]
          %v541 = vld [vmem:[%s3 + $0x78] sm:$0xff]
          %542 = vmatprep.subr.mxu0 0.0
          %543 = vmatpush1.msra.mxu0 %v526
          %544 = vmatprep.subr.mxu0 0.0
          %545 = vmatpush1.msra.mxu0 %v527
          %546 = vmatprep.subr.mxu0 0.0
          %547 = vmatpush1.msra.mxu0 %v528
          %548 = vmatprep.subr.mxu0 0.0
          %549 = vmatpush1.msra.mxu0 %v529
          %550 = vmatprep.subr.mxu0 0.0
          %551 = vmatpush1.msra.mxu0 %v530
          %552 = vmatprep.subr.mxu0 0.0
          %553 = vmatpush1.msra.mxu0 %v531
          %554 = vmatprep.subr.mxu0 0.0
          %555 = vmatpush1.msra.mxu0 %v532
          %556 = vmatprep.subr.mxu0 0.0
          %557 = vmatpush1.msra.mxu0 %v533
          %558 = vmatprep.subr.mxu0 0.0
          %559 = vmatpush1.msra.mxu0 %v534
          %560 = vmatprep.subr.mxu0 0.0
          %561 = vmatpush1.msra.mxu0 %v535
          %562 = vmatprep.subr.mxu0 0.0
          %563 = vmatpush1.msra.mxu0 %v536
          %564 = vmatprep.subr.mxu0 0.0
          %565 = vmatpush1.msra.mxu0 %v537
          %566 = vmatprep.subr.mxu0 0.0
          %567 = vmatpush1.msra.mxu0 %v538
          %568 = vmatprep.subr.mxu0 0.0
          %569 = vmatpush1.msra.mxu0 %v539
          %570 = vmatprep.subr.mxu0 0.0
          %571 = vmatpush1.msra.mxu0 %v540
          %572 = vmatprep.subr.mxu0 0.0
          %573 = vmatpush1.msra.mxu0 %v541
          %574 = vmatprep.subr.mxu0 0.0
          %575 = vmatpush1.msra.mxu0 0.0
          %576 = vmatprep.subr.mxu0 0.0
          %577 = vmatpush1.msra.mxu0 0.0
          %578 = vmatprep.subr.mxu0 0.0
          %579 = vmatpush1.msra.mxu0 0.0
          %580 = vmatprep.subr.mxu0 0.0
          %581 = vmatpush1.msra.mxu0 0.0
          %582 = vmatprep.subr.mxu0 0.0
          %583 = vmatpush1.msra.mxu0 0.0
          %584 = vmatprep.subr.mxu0 0.0
          %585 = vmatpush1.msra.mxu0 0.0
          %586 = vmatprep.subr.mxu0 0.0
          %587 = vmatpush1.msra.mxu0 0.0
          %588 = vmatprep.subr.mxu0 0.0
          %589 = vmatpush1.msra.mxu0 0.0
          %590 = vmatprep.subr.mxu0 0.0
          %591 = vmatpush1.msra.mxu0 0.0
          %592 = vmatprep.subr.mxu0 0.0
          %593 = vmatpush1.msra.mxu0 0.0
          %594 = vmatprep.subr.mxu0 0.0
          %595 = vmatpush1.msra.mxu0 0.0
          %596 = vmatprep.subr.mxu0 0.0
          %597 = vmatpush1.msra.mxu0 0.0
          %598 = vmatprep.subr.mxu0 0.0
          %599 = vmatpush1.msra.mxu0 0.0
          %600 = vmatprep.subr.mxu0 0.0
          %601 = vmatpush1.msra.mxu0 0.0
          %602 = vmatprep.subr.mxu0 0.0
          %603 = vmatpush1.msra.mxu0 0.0
          %604 = vmatprep.subr.mxu0 0.0
          %605 = vmatpush1.msra.mxu0 0.0
          %606 = vmatprep.mubr.f32.mxu0 0.0
          %607 = vmatmul.mubr.f32.gmra.mrb[0].mxu0 %v525
          %v608 = vpop.f32.mrb[0].mxu0
          %v609 = vadd.f32 0.0, %v608
          %v610 = vpop.f32.mrb[0].mxu0
          %611 = vdwg.mxu0
          %v612 = vrcp.pop 1024.0
          %v613 = vmul.f32 %v609, %v612
          %v614 = vmul.f32 %v613, %v613
          %v616 = vrot.slane %v614, 7
          %v618 = vsub.f32 %v613, %v616
          %v619 = vmax.f32 %v618, 0.0
          %v620 = vadd.f32 %v619, 1e-05
          %v621 = vrsqrt.pop %v620
          %v622 = vsel %vm524, %v613, %v621
          %v623 = vld [vmem:[%s4] sm:$0xff]
          %v624 = vld [vmem:[%s4 + $0x8] sm:$0xff]
          %v625 = vld [vmem:[%s4 + $0x10] sm:$0xff]
          %v626 = vld [vmem:[%s4 + $0x18] sm:$0xff]
          %vm627 = vcmask 261120
          %v629 = vsel %vm627, %v622, 0
          %631 = vmatprep.subr.mxu0 0.0
          %632 = vmatpush1.msra.mxu0 %v623
          %633 = vmatprep.subr.mxu0 0.0
          %634 = vmatpush1.msra.mxu0 %v624
          %635 = vmatprep.subr.mxu0 0.0
          %636 = vmatpush1.msra.mxu0 %v625
          %637 = vmatprep.subr.mxu0 0.0
          %638 = vmatpush1.msra.mxu0 %v626
          %639 = vmatprep.subr.mxu0 0.0
          %640 = vmatpush1.msra.mxu0 0.0
          %641 = vmatprep.subr.mxu0 0.0
          %642 = vmatpush1.msra.mxu0 0.0
          %643 = vmatprep.subr.mxu0 0.0
          %644 = vmatpush1.msra.mxu0 0.0
          %645 = vmatprep.subr.mxu0 0.0
          %646 = vmatpush1.msra.mxu0 0.0
          %647 = vmatprep.subr.mxu0 0.0
          %648 = vmatpush1.msra.mxu0 0.0
          %649 = vmatprep.subr.mxu0 0.0
          %650 = vmatpush1.msra.mxu0 0.0
          %651 = vmatprep.subr.mxu0 0.0
          %652 = vmatpush1.msra.mxu0 0.0
          %653 = vmatprep.subr.mxu0 0.0
          %654 = vmatpush1.msra.mxu0 0.0
          %655 = vmatprep.subr.mxu0 0.0
          %656 = vmatpush1.msra.mxu0 0.0
          %657 = vmatprep.subr.mxu0 0.0
          %658 = vmatpush1.msra.mxu0 0.0
          %659 = vmatprep.subr.mxu0 0.0
          %660 = vmatpush1.msra.mxu0 0.0
          %661 = vmatprep.subr.mxu0 0.0
          %662 = vmatpush1.msra.mxu0 0.0
          %663 = vmatprep.subr.mxu0 0.0
          %664 = vmatpush1.msra.mxu0 0.0
          %665 = vmatprep.subr.mxu0 0.0
          %666 = vmatpush1.msra.mxu0 0.0
          %667 = vmatprep.subr.mxu0 0.0
          %668 = vmatpush1.msra.mxu0 0.0
          %669 = vmatprep.subr.mxu0 0.0
          %670 = vmatpush1.msra.mxu0 0.0
          %671 = vmatprep.subr.mxu0 0.0
          %672 = vmatpush1.msra.mxu0 0.0
          %673 = vmatprep.subr.mxu0 0.0
          %674 = vmatpush1.msra.mxu0 0.0
          %675 = vmatprep.subr.mxu0 0.0
          %676 = vmatpush1.msra.mxu0 0.0
          %677 = vmatprep.subr.mxu0 0.0
          %678 = vmatpush1.msra.mxu0 0.0
          %679 = vmatprep.subr.mxu0 0.0
          %680 = vmatpush1.msra.mxu0 0.0
          %681 = vmatprep.subr.mxu0 0.0
          %682 = vmatpush1.msra.mxu0 0.0
          %683 = vmatprep.subr.mxu0 0.0
          %684 = vmatpush1.msra.mxu0 0.0
          %685 = vmatprep.subr.mxu0 0.0
          %686 = vmatpush1.msra.mxu0 0.0
          %687 = vmatprep.subr.mxu0 0.0
          %688 = vmatpush1.msra.mxu0 0.0
          %689 = vmatprep.subr.mxu0 0.0
          %690 = vmatpush1.msra.mxu0 0.0
          %691 = vmatprep.subr.mxu0 0.0
          %692 = vmatpush1.msra.mxu0 0.0
          %693 = vmatprep.subr.mxu0 0.0
          %694 = vmatpush1.msra.mxu0 0.0
          %695 = vmatprep.mubr.f32.mxu0 0.0
          %696 = vmatmul.mubr.f32.gmra.mrb[0].mxu0 %v629
          %v697 = vpop.f32.mrb[0].mxu0
          %v698 = vadd.f32 0.0, %v697
          %v699 = vpop.f32.mrb[0].mxu0
          %700 = vdwg.mxu0
          %v701 = vlaneseq
          %v702 = vshrl.u32 %v701, 7
          %v703 = vsub.s32 0, %v702
          %v704 = vrot.slane %v698, %v703
          %v705 = vsub.f32 %v386, %v704
          %v706 = vsub.f32 %v387, %v704
          %v707 = vsub.f32 %v388, %v704
          %v708 = vsub.f32 %v389, %v704
          %v709 = vsub.f32 %v390, %v704
          %v710 = vsub.f32 %v391, %v704
          %v711 = vsub.f32 %v392, %v704
          %v712 = vsub.f32 %v393, %v704
          %v713 = vsub.f32 %v394, %v704
          %v714 = vsub.f32 %v395, %v704
          %v715 = vsub.f32 %v396, %v704
          %v716 = vsub.f32 %v397, %v704
          %v717 = vsub.f32 %v398, %v704
          %v718 = vsub.f32 %v399, %v704
          %v719 = vsub.f32 %v400, %v704
          %v720 = vsub.f32 %v401, %v704
          %v721 = vsub.f32 %v402, %v704
          %v722 = vsub.f32 %v403, %v704
          %v723 = vsub.f32 %v404, %v704
          %v724 = vsub.f32 %v405, %v704
          %v725 = vsub.f32 %v406, %v704
          %v726 = vsub.f32 %v407, %v704
          %v727 = vsub.f32 %v408, %v704
          %v728 = vsub.f32 %v409, %v704
          %v729 = vsub.f32 %v410, %v704
          %v730 = vsub.f32 %v411, %v704
          %v731 = vsub.f32 %v412, %v704
          %v732 = vsub.f32 %v413, %v704
          %v733 = vsub.f32 %v414, %v704
          %v734 = vsub.f32 %v415, %v704
          %v735 = vsub.f32 %v416, %v704
          %v736 = vsub.f32 %v417, %v704
          %v737 = vlaneseq
          %v738 = vshrl.u32 %v737, 7
          %v739 = vsub.s32 1, %v738
          %v740 = vrot.slane %v698, %v739
          %v741 = vmul.f32 %v705, %v740
          %v742 = vmul.f32 %v706, %v740
          %v743 = vmul.f32 %v707, %v740
          %v744 = vmul.f32 %v708, %v740
          %v745 = vmul.f32 %v709, %v740
          %v746 = vmul.f32 %v710, %v740
          %v747 = vmul.f32 %v711, %v740
          %v748 = vmul.f32 %v712, %v740
          %v749 = vmul.f32 %v713, %v740
          %v750 = vmul.f32 %v714, %v740
          %v751 = vmul.f32 %v715, %v740
          %v752 = vmul.f32 %v716, %v740
          %v753 = vmul.f32 %v717, %v740
          %v754 = vmul.f32 %v718, %v740
          %v755 = vmul.f32 %v719, %v740
          %v756 = vmul.f32 %v720, %v740
          %v757 = vmul.f32 %v721, %v740
          %v758 = vmul.f32 %v722, %v740
          %v759 = vmul.f32 %v723, %v740
          %v760 = vmul.f32 %v724, %v740
          %v761 = vmul.f32 %v725, %v740
          %v762 = vmul.f32 %v726, %v740
          %v763 = vmul.f32 %v727, %v740
          %v764 = vmul.f32 %v728, %v740
          %v765 = vmul.f32 %v729, %v740
          %v766 = vmul.f32 %v730, %v740
          %v767 = vmul.f32 %v731, %v740
          %v768 = vmul.f32 %v732, %v740
          %v769 = vmul.f32 %v733, %v740
          %v770 = vmul.f32 %v734, %v740
          %v771 = vmul.f32 %v735, %v740
          %v772 = vmul.f32 %v736, %v740
          %v773 = vld [vmem:[%s1] sm:$0x1]
          %v775 = vlaneseq
          %v776 = vshrl.u32 %v775, 7
          %v777 = vsub.s32 0, %v776
          %v778 = vrot.slane %v773, %v777
          %v780 = vmul.f32 %v741, %v778
          %v781 = vmul.f32 %v742, %v778
          %v782 = vmul.f32 %v743, %v778
          %v783 = vmul.f32 %v744, %v778
          %v784 = vmul.f32 %v745, %v778
          %v785 = vmul.f32 %v746, %v778
          %v786 = vmul.f32 %v747, %v778
          %v787 = vmul.f32 %v748, %v778
          %v788 = vmul.f32 %v749, %v778
          %v789 = vmul.f32 %v750, %v778
          %v790 = vmul.f32 %v751, %v778
          %v791 = vmul.f32 %v752, %v778
          %v792 = vmul.f32 %v753, %v778
          %v793 = vmul.f32 %v754, %v778
          %v794 = vmul.f32 %v755, %v778
          %v795 = vmul.f32 %v756, %v778
          %v796 = vmul.f32 %v757, %v778
          %v797 = vmul.f32 %v758, %v778
          %v798 = vmul.f32 %v759, %v778
          %v799 = vmul.f32 %v760, %v778
          %v800 = vmul.f32 %v761, %v778
          %v801 = vmul.f32 %v762, %v778
          %v802 = vmul.f32 %v763, %v778
          %v803 = vmul.f32 %v764, %v778
          %v804 = vmul.f32 %v765, %v778
          %v805 = vmul.f32 %v766, %v778
          %v806 = vmul.f32 %v767, %v778
          %v807 = vmul.f32 %v768, %v778
          %v808 = vmul.f32 %v769, %v778
          %v809 = vmul.f32 %v770, %v778
          %v810 = vmul.f32 %v771, %v778
          %v811 = vmul.f32 %v772, %v778
          %v812 = vld [vmem:[%s2] sm:$0x1]
          %v814 = vlaneseq
          %v815 = vshrl.u32 %v814, 7
          %v816 = vsub.s32 0, %v815
          %v817 = vrot.slane %v812, %v816
          %v819 = vadd.f32 %v780, %v817
          %v820 = vadd.f32 %v781, %v817
          %v821 = vadd.f32 %v782, %v817
          %v822 = vadd.f32 %v783, %v817
          %v823 = vadd.f32 %v784, %v817
          %v824 = vadd.f32 %v785, %v817
          %v825 = vadd.f32 %v786, %v817
          %v826 = vadd.f32 %v787, %v817
          %v827 = vadd.f32 %v788, %v817
          %v828 = vadd.f32 %v789, %v817
          %v829 = vadd.f32 %v790, %v817
          %v830 = vadd.f32 %v791, %v817
          %v831 = vadd.f32 %v792, %v817
          %v832 = vadd.f32 %v793, %v817
          %v833 = vadd.f32 %v794, %v817
          %v834 = vadd.f32 %v795, %v817
          %v835 = vadd.f32 %v796, %v817
          %v836 = vadd.f32 %v797, %v817
          %v837 = vadd.f32 %v798, %v817
          %v838 = vadd.f32 %v799, %v817
          %v839 = vadd.f32 %v800, %v817
          %v840 = vadd.f32 %v801, %v817
          %v841 = vadd.f32 %v802, %v817
          %v842 = vadd.f32 %v803, %v817
          %v843 = vadd.f32 %v804, %v817
          %v844 = vadd.f32 %v805, %v817
          %v845 = vadd.f32 %v806, %v817
          %v846 = vadd.f32 %v807, %v817
          %v847 = vadd.f32 %v808, %v817
          %v848 = vadd.f32 %v809, %v817
          %v849 = vadd.f32 %v810, %v817
          %v850 = vadd.f32 %v811, %v817
          %851 = vst [vmem:[#allocation2] sm:$0xff] %v819
          %852 = vst [vmem:[#allocation2 + $0x8] sm:$0xff] %v820
          %853 = vst [vmem:[#allocation2 + $0x10] sm:$0xff] %v821
          %854 = vst [vmem:[#allocation2 + $0x18] sm:$0xff] %v822
          %855 = vst [vmem:[#allocation2 + $0x20] sm:$0xff] %v823
          %856 = vst [vmem:[#allocation2 + $0x28] sm:$0xff] %v824
          %857 = vst [vmem:[#allocation2 + $0x30] sm:$0xff] %v825
          %858 = vst [vmem:[#allocation2 + $0x38] sm:$0xff] %v826
          %859 = vst [vmem:[#allocation2 + $0x40] sm:$0xff] %v827
          %860 = vst [vmem:[#allocation2 + $0x48] sm:$0xff] %v828
          %861 = vst [vmem:[#allocation2 + $0x50] sm:$0xff] %v829
          %862 = vst [vmem:[#allocation2 + $0x58] sm:$0xff] %v830
          %863 = vst [vmem:[#allocation2 + $0x60] sm:$0xff] %v831
          %864 = vst [vmem:[#allocation2 + $0x68] sm:$0xff] %v832
          %865 = vst [vmem:[#allocation2 + $0x70] sm:$0xff] %v833
          %866 = vst [vmem:[#allocation2 + $0x78] sm:$0xff] %v834
          %867 = vst [vmem:[#allocation2 + $0x80] sm:$0xff] %v835
          %868 = vst [vmem:[#allocation2 + $0x88] sm:$0xff] %v836
          %869 = vst [vmem:[#allocation2 + $0x90] sm:$0xff] %v837
          %870 = vst [vmem:[#allocation2 + $0x98] sm:$0xff] %v838
          %871 = vst [vmem:[#allocation2 + $0xa0] sm:$0xff] %v839
          %872 = vst [vmem:[#allocation2 + $0xa8] sm:$0xff] %v840
          %873 = vst [vmem:[#allocation2 + $0xb0] sm:$0xff] %v841
          %874 = vst [vmem:[#allocation2 + $0xb8] sm:$0xff] %v842
          %875 = vst [vmem:[#allocation2 + $0xc0] sm:$0xff] %v843
          %876 = vst [vmem:[#allocation2 + $0xc8] sm:$0xff] %v844
          %877 = vst [vmem:[#allocation2 + $0xd0] sm:$0xff] %v845
          %878 = vst [vmem:[#allocation2 + $0xd8] sm:$0xff] %v846
          %879 = vst [vmem:[#allocation2 + $0xe0] sm:$0xff] %v847
          %880 = vst [vmem:[#allocation2 + $0xe8] sm:$0xff] %v848
          %881 = vst [vmem:[#allocation2 + $0xf0] sm:$0xff] %v849
          %882 = vst [vmem:[#allocation2 + $0xf8] sm:$0xff] %v850
          %v883 = vpack.c.bf16 %v820, %v819
          %v884 = vpack.c.bf16 %v822, %v821
          %v885 = vpack.c.bf16 %v824, %v823
          %v886 = vpack.c.bf16 %v826, %v825
          %v887 = vpack.c.bf16 %v828, %v827
          %v888 = vpack.c.bf16 %v830, %v829
          %v889 = vpack.c.bf16 %v832, %v831
          %v890 = vpack.c.bf16 %v834, %v833
          %v891 = vpack.c.bf16 %v836, %v835
          %v892 = vpack.c.bf16 %v838, %v837
          %v893 = vpack.c.bf16 %v840, %v839
          %v894 = vpack.c.bf16 %v842, %v841
          %v895 = vpack.c.bf16 %v844, %v843
          %v896 = vpack.c.bf16 %v846, %v845
          %v897 = vpack.c.bf16 %v848, %v847
          %v898 = vpack.c.bf16 %v850, %v849
          %v899 = vld [vmem:[#allocation9] sm:$0xff]
          %v900 = vld [vmem:[#allocation9 + $0x8] sm:$0xf]
          %v901 = vld [vmem:[#allocation9 + $0xc] sm:$0xff]
          %v902 = vld [vmem:[#allocation9 + $0x14] sm:$0xf]
          %v903 = vld [vmem:[#allocation9 + $0x18] sm:$0xff]
          %v904 = vld [vmem:[#allocation9 + $0x20] sm:$0xf]
          %v905 = vld [vmem:[#allocation9 + $0x24] sm:$0xff]
          %v906 = vld [vmem:[#allocation9 + $0x2c] sm:$0xf]
          %v907 = vld [vmem:[#allocation9 + $0x30] sm:$0xff]
          %v908 = vld [vmem:[#allocation9 + $0x38] sm:$0xf]
          %v909 = vld [vmem:[#allocation9 + $0x3c] sm:$0xff]
          %v910 = vld [vmem:[#allocation9 + $0x44] sm:$0xf]
          %v911 = vld [vmem:[#allocation9 + $0x48] sm:$0xff]
          %v912 = vld [vmem:[#allocation9 + $0x50] sm:$0xf]
          %v913 = vld [vmem:[#allocation9 + $0x54] sm:$0xff]
          %v914 = vld [vmem:[#allocation9 + $0x5c] sm:$0xf]
          %v915 = vld [vmem:[#allocation9 + $0x60] sm:$0xff]
          %v916 = vld [vmem:[#allocation9 + $0x68] sm:$0xf]
          %v917 = vld [vmem:[#allocation9 + $0x6c] sm:$0xff]
          %v918 = vld [vmem:[#allocation9 + $0x74] sm:$0xf]
          %v919 = vld [vmem:[#allocation9 + $0x78] sm:$0xff]
          %v920 = vld [vmem:[#allocation9 + $0x80] sm:$0xf]
          %v921 = vld [vmem:[#allocation9 + $0x84] sm:$0xff]
          %v922 = vld [vmem:[#allocation9 + $0x8c] sm:$0xf]
          %v923 = vld [vmem:[#allocation9 + $0x90] sm:$0xff]
          %v924 = vld [vmem:[#allocation9 + $0x98] sm:$0xf]
          %v925 = vld [vmem:[#allocation9 + $0x9c] sm:$0xff]
          %v926 = vld [vmem:[#allocation9 + $0xa4] sm:$0xf]
          %v927 = vld [vmem:[#allocation9 + $0xa8] sm:$0xff]
          %v928 = vld [vmem:[#allocation9 + $0xb0] sm:$0xf]
          %v929 = vld [vmem:[#allocation9 + $0xb4] sm:$0xff]
          %v930 = vld [vmem:[#allocation9 + $0xbc] sm:$0xf]
          %v931 = vld [vmem:[%s6] sm:$0x7]
          %v933 = vlaneseq
          %v934 = vshrl.u32 %v933, 7
          %v935 = vsub.s32 0, %v934
          %v936 = vrot.slane %v931, %v935
          %v937 = vlaneseq
          %v938 = vshrl.u32 %v937, 7
          %v939 = vsub.s32 1, %v938
          %v940 = vrot.slane %v931, %v939
          %v941 = vlaneseq
          %v942 = vshrl.u32 %v941, 7
          %v943 = vsub.s32 2, %v942
          %v944 = vrot.slane %v931, %v943
          %v980 = vunpack.c.l.b16 %v899
          %v981 = vunpack.c.h.b16 %v899
          %v982 = vunpack.c.l.b16 %v900
          %v983 = vunpack.c.l.b16 %v901
          %v984 = vunpack.c.h.b16 %v901
          %v985 = vunpack.c.l.b16 %v902
          %v986 = vunpack.c.l.b16 %v903
          %v987 = vunpack.c.h.b16 %v903
          %v988 = vunpack.c.l.b16 %v904
          %v989 = vunpack.c.l.b16 %v905
          %v990 = vunpack.c.h.b16 %v905
          %v991 = vunpack.c.l.b16 %v906
          %v992 = vunpack.c.l.b16 %v907
          %v993 = vunpack.c.h.b16 %v907
          %v994 = vunpack.c.l.b16 %v908
          %v995 = vunpack.c.l.b16 %v909
          %v996 = vunpack.c.h.b16 %v909
          %v997 = vunpack.c.l.b16 %v910
          %v998 = vunpack.c.l.b16 %v911
          %v999 = vunpack.c.h.b16 %v911
          %v1000 = vunpack.c.l.b16 %v912
          %v1001 = vunpack.c.l.b16 %v913
          %v1002 = vunpack.c.h.b16 %v913
          %v1003 = vunpack.c.l.b16 %v914
          %v1004 = vunpack.c.l.b16 %v915
          %v1005 = vunpack.c.h.b16 %v915
          %v1006 = vunpack.c.l.b16 %v916
          %v1007 = vunpack.c.l.b16 %v917
          %v1008 = vunpack.c.h.b16 %v917
          %v1009 = vunpack.c.l.b16 %v918
          %v1010 = vunpack.c.l.b16 %v919
          %v1011 = vunpack.c.h.b16 %v919
          %v1012 = vunpack.c.l.b16 %v920
          %v1013 = vunpack.c.l.b16 %v921
          %v1014 = vunpack.c.h.b16 %v921
          %v1015 = vunpack.c.l.b16 %v922
          %v1016 = vunpack.c.l.b16 %v923
          %v1017 = vunpack.c.h.b16 %v923
          %v1018 = vunpack.c.l.b16 %v924
          %v1019 = vunpack.c.l.b16 %v925
          %v1020 = vunpack.c.h.b16 %v925
          %v1021 = vunpack.c.l.b16 %v926
          %v1022 = vunpack.c.l.b16 %v927
          %v1023 = vunpack.c.h.b16 %v927
          %v1024 = vunpack.c.l.b16 %v928
          %v1025 = vunpack.c.l.b16 %v929
          %v1026 = vunpack.c.h.b16 %v929
          %v1027 = vunpack.c.l.b16 %v930
          %v1028 = vpack.c.b16 %v983, %v980
          %v1029 = vpack.c.b16 %v984, %v981
          %v1030 = vpack.c.b16 %v985, %v982
          %v1031 = vpack.c.b16 %v989, %v986
          %v1032 = vpack.c.b16 %v990, %v987
          %v1033 = vpack.c.b16 %v991, %v988
          %v1034 = vpack.c.b16 %v995, %v992
          %v1035 = vpack.c.b16 %v996, %v993
          %v1036 = vpack.c.b16 %v997, %v994
          %v1037 = vpack.c.b16 %v1001, %v998
          %v1038 = vpack.c.b16 %v1002, %v999
          %v1039 = vpack.c.b16 %v1003, %v1000
          %v1040 = vpack.c.b16 %v1007, %v1004
          %v1041 = vpack.c.b16 %v1008, %v1005
          %v1042 = vpack.c.b16 %v1009, %v1006
          %v1043 = vpack.c.b16 %v1013, %v1010
          %v1044 = vpack.c.b16 %v1014, %v1011
          %v1045 = vpack.c.b16 %v1015, %v1012
          %v1046 = vpack.c.b16 %v1019, %v1016
          %v1047 = vpack.c.b16 %v1020, %v1017
          %v1048 = vpack.c.b16 %v1021, %v1018
          %v1049 = vpack.c.b16 %v1025, %v1022
          %v1050 = vpack.c.b16 %v1026, %v1023
          %v1051 = vpack.c.b16 %v1027, %v1024
          %1076 = vmatprep.subr.bf16.mxu0 %v1029
          %1077 = vmatpush1.bf16.msra.mxu0 %v1028
          %1078 = vmatprep.subr.bf16.mxu0 %v1032
          %1079 = vmatpush1.bf16.msra.mxu0 %v1031
          %1080 = vmatprep.subr.bf16.mxu0 %v1035
          %1081 = vmatpush1.bf16.msra.mxu0 %v1034
          %1082 = vmatprep.subr.bf16.mxu0 %v1038
          %1083 = vmatpush1.bf16.msra.mxu0 %v1037
          %1084 = vmatprep.subr.bf16.mxu0 %v1041
          %1085 = vmatpush1.bf16.msra.mxu0 %v1040
          %1086 = vmatprep.subr.bf16.mxu0 %v1044
          %1087 = vmatpush1.bf16.msra.mxu0 %v1043
          %1088 = vmatprep.subr.bf16.mxu0 %v1047
          %1089 = vmatpush1.bf16.msra.mxu0 %v1046
          %1090 = vmatprep.subr.bf16.mxu0 %v1050
          %1091 = vmatpush1.bf16.msra.mxu0 %v1049
          %1092 = vmatprep.subr.bf16.mxu0 0
          %1093 = vmatpush1.bf16.msra.mxu0 0
          %1094 = vmatprep.subr.bf16.mxu0 0
          %1095 = vmatpush1.bf16.msra.mxu0 0
          %1096 = vmatprep.subr.bf16.mxu0 0
          %1097 = vmatpush1.bf16.msra.mxu0 0
          %1098 = vmatprep.subr.bf16.mxu0 0
          %1099 = vmatpush1.bf16.msra.mxu0 0
          %1100 = vmatprep.subr.bf16.mxu0 0
          %1101 = vmatpush1.bf16.msra.mxu0 0
          %1102 = vmatprep.subr.bf16.mxu0 0
          %1103 = vmatpush1.bf16.msra.mxu0 0
          %1104 = vmatprep.subr.bf16.mxu0 0
          %1105 = vmatpush1.bf16.msra.mxu0 0
          %1106 = vmatprep.subr.bf16.mxu0 0
          %1107 = vmatpush1.bf16.msra.mxu0 0
          %1108 = vmatprep.mubr.bf16.mxu0 0
          %1109 = vmatmul.mubr.bf16.gmra.mrb[0].mxu0 %v883
          %v1110 = vpop.f32.mrb[0].mxu0
          %v1111 = vadd.f32 %v936, %v1110
          %v1112 = vpop.f32.mrb[0].mxu0
          %v1113 = vadd.f32 %v940, %v1112
          %v1114 = vpop.f32.mrb[0].mxu0
          %v1115 = vadd.f32 %v936, %v1114
          %v1116 = vpop.f32.mrb[0].mxu0
          %v1117 = vadd.f32 %v940, %v1116
          %1118 = vmatprep.mubr.bf16.mxu0 0
          %1119 = vmatmul.mubr.bf16.gmra.mrb[0].mxu0 %v884
          %v1120 = vpop.f32.mrb[0].mxu0
          %v1121 = vadd.f32 %v936, %v1120
          %v1122 = vpop.f32.mrb[0].mxu0
          %v1123 = vadd.f32 %v940, %v1122
          %v1124 = vpop.f32.mrb[0].mxu0
          %v1125 = vadd.f32 %v936, %v1124
          %v1126 = vpop.f32.mrb[0].mxu0
          %v1127 = vadd.f32 %v940, %v1126
          %1128 = vmatprep.mubr.bf16.mxu0 0
          %1129 = vmatmul.mubr.bf16.gmra.mrb[0].mxu0 %v885
          %v1130 = vpop.f32.mrb[0].mxu0
          %v1131 = vadd.f32 %v936, %v1130
          %v1132 = vpop.f32.mrb[0].mxu0
          %v1133 = vadd.f32 %v940, %v1132
          %v1134 = vpop.f32.mrb[0].mxu0
          %v1135 = vadd.f32 %v936, %v1134
          %v1136 = vpop.f32.mrb[0].mxu0
          %v1137 = vadd.f32 %v940, %v1136
          %1138 = vmatprep.mubr.bf16.mxu0 0
          %1139 = vmatmul.mubr.bf16.gmra.mrb[0].mxu0 %v886
          %v1140 = vpop.f32.mrb[0].mxu0
          %v1141 = vadd.f32 %v936, %v1140
          %v1142 = vpop.f32.mrb[0].mxu0
          %v1143 = vadd.f32 %v940, %v1142
          %v1144 = vpop.f32.mrb[0].mxu0
          %v1145 = vadd.f32 %v936, %v1144
          %v1146 = vpop.f32.mrb[0].mxu0
          %v1147 = vadd.f32 %v940, %v1146
          %1148 = vmatprep.mubr.bf16.mxu0 0
          %1149 = vmatmul.mubr.bf16.gmra.mrb[0].mxu0 %v887
          %v1150 = vpop.f32.mrb[0].mxu0
          %v1151 = vadd.f32 %v936, %v1150
          %v1152 = vpop.f32.mrb[0].mxu0
          %v1153 = vadd.f32 %v940, %v1152
          %v1154 = vpop.f32.mrb[0].mxu0
          %v1155 = vadd.f32 %v936, %v1154
          %v1156 = vpop.f32.mrb[0].mxu0
          %v1157 = vadd.f32 %v940, %v1156
          %1158 = vmatprep.mubr.bf16.mxu0 0
          %1159 = vmatmul.mubr.bf16.gmra.mrb[0].mxu0 %v888
          %v1160 = vpop.f32.mrb[0].mxu0
          %v1161 = vadd.f32 %v936, %v1160
          %v1162 = vpop.f32.mrb[0].mxu0
          %v1163 = vadd.f32 %v940, %v1162
          %v1164 = vpop.f32.mrb[0].mxu0
          %v1165 = vadd.f32 %v936, %v1164
          %v1166 = vpop.f32.mrb[0].mxu0
          %v1167 = vadd.f32 %v940, %v1166
          %1168 = vmatprep.mubr.bf16.mxu0 0
          %1169 = vmatmul.mubr.bf16.gmra.mrb[0].mxu0 %v889
          %v1170 = vpop.f32.mrb[0].mxu0
          %v1171 = vadd.f32 %v936, %v1170
          %v1172 = vpop.f32.mrb[0].mxu0
          %v1173 = vadd.f32 %v940, %v1172
          %v1174 = vpop.f32.mrb[0].mxu0
          %v1175 = vadd.f32 %v936, %v1174
          %v1176 = vpop.f32.mrb[0].mxu0
          %v1177 = vadd.f32 %v940, %v1176
          %1178 = vmatprep.mubr.bf16.mxu0 0
          %1179 = vmatmul.mubr.bf16.gmra.mrb[0].mxu0 %v890
          %v1180 = vpop.f32.mrb[0].mxu0
          %v1181 = vadd.f32 %v936, %v1180
          %v1182 = vpop.f32.mrb[0].mxu0
          %v1183 = vadd.f32 %v940, %v1182
          %v1184 = vpop.f32.mrb[0].mxu0
          %v1185 = vadd.f32 %v936, %v1184
          %v1186 = vpop.f32.mrb[0].mxu0
          %v1187 = vadd.f32 %v940, %v1186
          %1188 = vmatprep.mubr.bf16.mxu0 0
          %1189 = vmatmul.mubr.bf16.gmra.mrb[0].mxu0 %v891
          %v1190 = vpop.f32.mrb[0].mxu0
          %v1191 = vadd.f32 %v936, %v1190
          %v1192 = vpop.f32.mrb[0].mxu0
          %v1193 = vadd.f32 %v940, %v1192
          %v1194 = vpop.f32.mrb[0].mxu0
          %v1195 = vadd.f32 %v936, %v1194
          %v1196 = vpop.f32.mrb[0].mxu0
          %v1197 = vadd.f32 %v940, %v1196
          %1198 = vmatprep.mubr.bf16.mxu0 0
          %1199 = vmatmul.mubr.bf16.gmra.mrb[0].mxu0 %v892
          %v1200 = vpop.f32.mrb[0].mxu0
          %v1201 = vadd.f32 %v936, %v1200
          %v1202 = vpop.f32.mrb[0].mxu0
          %v1203 = vadd.f32 %v940, %v1202
          %v1204 = vpop.f32.mrb[0].mxu0
          %v1205 = vadd.f32 %v936, %v1204
          %v1206 = vpop.f32.mrb[0].mxu0
          %v1207 = vadd.f32 %v940, %v1206
          %1208 = vmatprep.mubr.bf16.mxu0 0
          %1209 = vmatmul.mubr.bf16.gmra.mrb[0].mxu0 %v893
          %v1210 = vpop.f32.mrb[0].mxu0
          %v1211 = vadd.f32 %v936, %v1210
          %v1212 = vpop.f32.mrb[0].mxu0
          %v1213 = vadd.f32 %v940, %v1212
          %v1214 = vpop.f32.mrb[0].mxu0
          %v1215 = vadd.f32 %v936, %v1214
          %v1216 = vpop.f32.mrb[0].mxu0
          %v1217 = vadd.f32 %v940, %v1216
          %1218 = vmatprep.mubr.bf16.mxu0 0
          %1219 = vmatmul.mubr.bf16.gmra.mrb[0].mxu0 %v894
          %v1220 = vpop.f32.mrb[0].mxu0
          %v1221 = vadd.f32 %v936, %v1220
          %v1222 = vpop.f32.mrb[0].mxu0
          %v1223 = vadd.f32 %v940, %v1222
          %v1224 = vpop.f32.mrb[0].mxu0
          %v1225 = vadd.f32 %v936, %v1224
          %v1226 = vpop.f32.mrb[0].mxu0
          %v1227 = vadd.f32 %v940, %v1226
          %1228 = vmatprep.mubr.bf16.mxu0 0
          %1229 = vmatmul.mubr.bf16.gmra.mrb[0].mxu0 %v895
          %v1230 = vpop.f32.mrb[0].mxu0
          %v1231 = vadd.f32 %v936, %v1230
          %v1232 = vpop.f32.mrb[0].mxu0
          %v1233 = vadd.f32 %v940, %v1232
          %v1234 = vpop.f32.mrb[0].mxu0
          %v1235 = vadd.f32 %v936, %v1234
          %v1236 = vpop.f32.mrb[0].mxu0
          %v1237 = vadd.f32 %v940, %v1236
          %1238 = vmatprep.mubr.bf16.mxu0 0
          %1239 = vmatmul.mubr.bf16.gmra.mrb[0].mxu0 %v896
          %v1240 = vpop.f32.mrb[0].mxu0
          %v1241 = vadd.f32 %v936, %v1240
          %v1242 = vpop.f32.mrb[0].mxu0
          %v1243 = vadd.f32 %v940, %v1242
          %v1244 = vpop.f32.mrb[0].mxu0
          %v1245 = vadd.f32 %v936, %v1244
          %v1246 = vpop.f32.mrb[0].mxu0
          %v1247 = vadd.f32 %v940, %v1246
          %1248 = vmatprep.mubr.bf16.mxu0 0
          %1249 = vmatmul.mubr.bf16.gmra.mrb[0].mxu0 %v897
          %v1250 = vpop.f32.mrb[0].mxu0
          %v1251 = vadd.f32 %v936, %v1250
          %v1252 = vpop.f32.mrb[0].mxu0
          %v1253 = vadd.f32 %v940, %v1252
          %v1254 = vpop.f32.mrb[0].mxu0
          %v1255 = vadd.f32 %v936, %v1254
          %v1256 = vpop.f32.mrb[0].mxu0
          %v1257 = vadd.f32 %v940, %v1256
          %1258 = vmatprep.mubr.bf16.mxu0 0
          %1259 = vmatmul.mubr.bf16.gmra.mrb[0].mxu0 %v898
          %v1260 = vpop.f32.mrb[0].mxu0
          %v1261 = vadd.f32 %v936, %v1260
          %v1262 = vpop.f32.mrb[0].mxu0
          %v1263 = vadd.f32 %v940, %v1262
          %v1264 = vpop.f32.mrb[0].mxu0
          %v1265 = vadd.f32 %v936, %v1264
          %v1266 = vpop.f32.mrb[0].mxu0
          %v1267 = vadd.f32 %v940, %v1266
          %1268 = vdwg.mxu0
          %1269 = vmatprep.subr.bf16.mxu0 0
          %1270 = vmatpush1.bf16.msra.mxu0 %v1030
          %1271 = vmatprep.subr.bf16.mxu0 0
          %1272 = vmatpush1.bf16.msra.mxu0 %v1033
          %1273 = vmatprep.subr.bf16.mxu0 0
          %1274 = vmatpush1.bf16.msra.mxu0 %v1036
          %1275 = vmatprep.subr.bf16.mxu0 0
          %1276 = vmatpush1.bf16.msra.mxu0 %v1039
          %1277 = vmatprep.subr.bf16.mxu0 0
          %1278 = vmatpush1.bf16.msra.mxu0 %v1042
          %1279 = vmatprep.subr.bf16.mxu0 0
          %1280 = vmatpush1.bf16.msra.mxu0 %v1045
          %1281 = vmatprep.subr.bf16.mxu0 0
          %1282 = vmatpush1.bf16.msra.mxu0 %v1048
          %1283 = vmatprep.subr.bf16.mxu0 0
          %1284 = vmatpush1.bf16.msra.mxu0 %v1051
          %1285 = vmatprep.subr.bf16.mxu0 0
          %1286 = vmatpush1.bf16.msra.mxu0 0
          %1287 = vmatprep.subr.bf16.mxu0 0
          %1288 = vmatpush1.bf16.msra.mxu0 0
          %1289 = vmatprep.subr.bf16.mxu0 0
          %1290 = vmatpush1.bf16.msra.mxu0 0
          %1291 = vmatprep.subr.bf16.mxu0 0
          %1292 = vmatpush1.bf16.msra.mxu0 0
          %1293 = vmatprep.subr.bf16.mxu0 0
          %1294 = vmatpush1.bf16.msra.mxu0 0
          %1295 = vmatprep.subr.bf16.mxu0 0
          %1296 = vmatpush1.bf16.msra.mxu0 0
          %1297 = vmatprep.subr.bf16.mxu0 0
          %1298 = vmatpush1.bf16.msra.mxu0 0
          %1299 = vmatprep.subr.bf16.mxu0 0
          %1300 = vmatpush1.bf16.msra.mxu0 0
          %1301 = vmatprep.mubr.bf16.mxu0 0
          %1302 = vmatmul.mubr.bf16.gmra.mrb[0].mxu0 %v883
          %v1303 = vpop.f32.mrb[0].mxu0
          %v1304 = vadd.f32 %v944, %v1303
          %v1305 = vpop.f32.mrb[0].mxu0
          %v1306 = vpop.f32.mrb[0].mxu0
          %v1307 = vadd.f32 %v944, %v1306
          %v1308 = vpop.f32.mrb[0].mxu0
          %1309 = vmatprep.mubr.bf16.mxu0 0
          %1310 = vmatmul.mubr.bf16.gmra.mrb[0].mxu0 %v884
          %v1311 = vpop.f32.mrb[0].mxu0
          %v1312 = vadd.f32 %v944, %v1311
          %v1313 = vpop.f32.mrb[0].mxu0
          %v1314 = vpop.f32.mrb[0].mxu0
          %v1315 = vadd.f32 %v944, %v1314
          %v1316 = vpop.f32.mrb[0].mxu0
          %1317 = vmatprep.mubr.bf16.mxu0 0
          %1318 = vmatmul.mubr.bf16.gmra.mrb[0].mxu0 %v885
          %v1319 = vpop.f32.mrb[0].mxu0
          %v1320 = vadd.f32 %v944, %v1319
          %v1321 = vpop.f32.mrb[0].mxu0
          %v1322 = vpop.f32.mrb[0].mxu0
          %v1323 = vadd.f32 %v944, %v1322
          %v1324 = vpop.f32.mrb[0].mxu0
          %1325 = vmatprep.mubr.bf16.mxu0 0
          %1326 = vmatmul.mubr.bf16.gmra.mrb[0].mxu0 %v886
          %v1327 = vpop.f32.mrb[0].mxu0
          %v1328 = vadd.f32 %v944, %v1327
          %v1329 = vpop.f32.mrb[0].mxu0
          %v1330 = vpop.f32.mrb[0].mxu0
          %v1331 = vadd.f32 %v944, %v1330
          %v1332 = vpop.f32.mrb[0].mxu0
          %1333 = vmatprep.mubr.bf16.mxu0 0
          %1334 = vmatmul.mubr.bf16.gmra.mrb[0].mxu0 %v887
          %v1335 = vpop.f32.mrb[0].mxu0
          %v1336 = vadd.f32 %v944, %v1335
          %v1337 = vpop.f32.mrb[0].mxu0
          %v1338 = vpop.f32.mrb[0].mxu0
          %v1339 = vadd.f32 %v944, %v1338
          %v1340 = vpop.f32.mrb[0].mxu0
          %1341 = vmatprep.mubr.bf16.mxu0 0
          %1342 = vmatmul.mubr.bf16.gmra.mrb[0].mxu0 %v888
          %v1343 = vpop.f32.mrb[0].mxu0
          %v1344 = vadd.f32 %v944, %v1343
          %v1345 = vpop.f32.mrb[0].mxu0
          %v1346 = vpop.f32.mrb[0].mxu0
          %v1347 = vadd.f32 %v944, %v1346
          %v1348 = vpop.f32.mrb[0].mxu0
          %1349 = vmatprep.mubr.bf16.mxu0 0
          %1350 = vmatmul.mubr.bf16.gmra.mrb[0].mxu0 %v889
          %v1351 = vpop.f32.mrb[0].mxu0
          %v1352 = vadd.f32 %v944, %v1351
          %v1353 = vpop.f32.mrb[0].mxu0
          %v1354 = vpop.f32.mrb[0].mxu0
          %v1355 = vadd.f32 %v944, %v1354
          %v1356 = vpop.f32.mrb[0].mxu0
          %1357 = vmatprep.mubr.bf16.mxu0 0
          %1358 = vmatmul.mubr.bf16.gmra.mrb[0].mxu0 %v890
          %v1359 = vpop.f32.mrb[0].mxu0
          %v1360 = vadd.f32 %v944, %v1359
          %v1361 = vpop.f32.mrb[0].mxu0
          %v1362 = vpop.f32.mrb[0].mxu0
          %v1363 = vadd.f32 %v944, %v1362
          %v1364 = vpop.f32.mrb[0].mxu0
          %1365 = vmatprep.mubr.bf16.mxu0 0
          %1366 = vmatmul.mubr.bf16.gmra.mrb[0].mxu0 %v891
          %v1367 = vpop.f32.mrb[0].mxu0
          %v1368 = vadd.f32 %v944, %v1367
          %v1369 = vpop.f32.mrb[0].mxu0
          %v1370 = vpop.f32.mrb[0].mxu0
          %v1371 = vadd.f32 %v944, %v1370
          %v1372 = vpop.f32.mrb[0].mxu0
          %1373 = vmatprep.mubr.bf16.mxu0 0
          %1374 = vmatmul.mubr.bf16.gmra.mrb[0].mxu0 %v892
          %v1375 = vpop.f32.mrb[0].mxu0
          %v1376 = vadd.f32 %v944, %v1375
          %v1377 = vpop.f32.mrb[0].mxu0
          %v1378 = vpop.f32.mrb[0].mxu0
          %v1379 = vadd.f32 %v944, %v1378
          %v1380 = vpop.f32.mrb[0].mxu0
          %1381 = vmatprep.mubr.bf16.mxu0 0
          %1382 = vmatmul.mubr.bf16.gmra.mrb[0].mxu0 %v893
          %v1383 = vpop.f32.mrb[0].mxu0
          %v1384 = vadd.f32 %v944, %v1383
          %v1385 = vpop.f32.mrb[0].mxu0
          %v1386 = vpop.f32.mrb[0].mxu0
          %v1387 = vadd.f32 %v944, %v1386
          %v1388 = vpop.f32.mrb[0].mxu0
          %1389 = vmatprep.mubr.bf16.mxu0 0
          %1390 = vmatmul.mubr.bf16.gmra.mrb[0].mxu0 %v894
          %v1391 = vpop.f32.mrb[0].mxu0
          %v1392 = vadd.f32 %v944, %v1391
          %v1393 = vpop.f32.mrb[0].mxu0
          %v1394 = vpop.f32.mrb[0].mxu0
          %v1395 = vadd.f32 %v944, %v1394
          %v1396 = vpop.f32.mrb[0].mxu0
          %1397 = vmatprep.mubr.bf16.mxu0 0
          %1398 = vmatmul.mubr.bf16.gmra.mrb[0].mxu0 %v895
          %v1399 = vpop.f32.mrb[0].mxu0
          %v1400 = vadd.f32 %v944, %v1399
          %v1401 = vpop.f32.mrb[0].mxu0
          %v1402 = vpop.f32.mrb[0].mxu0
          %v1403 = vadd.f32 %v944, %v1402
          %v1404 = vpop.f32.mrb[0].mxu0
          %1405 = vmatprep.mubr.bf16.mxu0 0
          %1406 = vmatmul.mubr.bf16.gmra.mrb[0].mxu0 %v896
          %v1407 = vpop.f32.mrb[0].mxu0
          %v1408 = vadd.f32 %v944, %v1407
          %v1409 = vpop.f32.mrb[0].mxu0
          %v1410 = vpop.f32.mrb[0].mxu0
          %v1411 = vadd.f32 %v944, %v1410
          %v1412 = vpop.f32.mrb[0].mxu0
          %1413 = vmatprep.mubr.bf16.mxu0 0
          %1414 = vmatmul.mubr.bf16.gmra.mrb[0].mxu0 %v897
          %v1415 = vpop.f32.mrb[0].mxu0
          %v1416 = vadd.f32 %v944, %v1415
          %v1417 = vpop.f32.mrb[0].mxu0
          %v1418 = vpop.f32.mrb[0].mxu0
          %v1419 = vadd.f32 %v944, %v1418
          %v1420 = vpop.f32.mrb[0].mxu0
          %1421 = vmatprep.mubr.bf16.mxu0 0
          %1422 = vmatmul.mubr.bf16.gmra.mrb[0].mxu0 %v898
          %v1423 = vpop.f32.mrb[0].mxu0
          %v1424 = vadd.f32 %v944, %v1423
          %v1425 = vpop.f32.mrb[0].mxu0
          %v1426 = vpop.f32.mrb[0].mxu0
          %v1427 = vadd.f32 %v944, %v1426
          %v1428 = vpop.f32.mrb[0].mxu0
          %1429 = vdwg.mxu0
          %v1430 = vmul.f32 %v1111, 0.088388346
          %v1431 = vmul.f32 %v1115, 0.088388346
          %v1432 = vmul.f32 %v1121, 0.088388346
          %v1433 = vmul.f32 %v1125, 0.088388346
          %v1434 = vmul.f32 %v1131, 0.088388346
          %v1435 = vmul.f32 %v1135, 0.088388346
          %v1436 = vmul.f32 %v1141, 0.088388346
          %v1437 = vmul.f32 %v1145, 0.088388346
          %v1438 = vmul.f32 %v1151, 0.088388346
          %v1439 = vmul.f32 %v1155, 0.088388346
          %v1440 = vmul.f32 %v1161, 0.088388346
          %v1441 = vmul.f32 %v1165, 0.088388346
          %v1442 = vmul.f32 %v1171, 0.088388346
          %v1443 = vmul.f32 %v1175, 0.088388346
          %v1444 = vmul.f32 %v1181, 0.088388346
          %v1445 = vmul.f32 %v1185, 0.088388346
          %v1446 = vmul.f32 %v1191, 0.088388346
          %v1447 = vmul.f32 %v1195, 0.088388346
          %v1448 = vmul.f32 %v1201, 0.088388346
          %v1449 = vmul.f32 %v1205, 0.088388346
          %v1450 = vmul.f32 %v1211, 0.088388346
          %v1451 = vmul.f32 %v1215, 0.088388346
          %v1452 = vmul.f32 %v1221, 0.088388346
          %v1453 = vmul.f32 %v1225, 0.088388346
          %v1454 = vmul.f32 %v1231, 0.088388346
          %v1455 = vmul.f32 %v1235, 0.088388346
          %v1456 = vmul.f32 %v1241, 0.088388346
          %v1457 = vmul.f32 %v1245, 0.088388346
          %v1458 = vmul.f32 %v1251, 0.088388346
          %v1459 = vmul.f32 %v1255, 0.088388346
          %v1460 = vmul.f32 %v1261, 0.088388346
          %v1461 = vmul.f32 %v1265, 0.088388346
          %v1462 = vpack.c.bf16 %v1431, %v1430
          %v1463 = vpack.c.bf16 %v1433, %v1432
          %v1464 = vpack.c.bf16 %v1435, %v1434
          %v1465 = vpack.c.bf16 %v1437, %v1436
          %v1466 = vpack.c.bf16 %v1439, %v1438
          %v1467 = vpack.c.bf16 %v1441, %v1440
          %v1468 = vpack.c.bf16 %v1443, %v1442
          %v1469 = vpack.c.bf16 %v1445, %v1444
          %v1470 = vpack.c.bf16 %v1447, %v1446
          %v1471 = vpack.c.bf16 %v1449, %v1448
          %v1472 = vpack.c.bf16 %v1451, %v1450
          %v1473 = vpack.c.bf16 %v1453, %v1452
          %v1474 = vpack.c.bf16 %v1455, %v1454
          %v1475 = vpack.c.bf16 %v1457, %v1456
          %v1476 = vpack.c.bf16 %v1459, %v1458
          %v1477 = vpack.c.bf16 %v1461, %v1460
          %1478 = vst [vmem:[#allocation3] sm:$0xff] %v1462
          %1479 = vst [vmem:[#allocation3 + $0x8] sm:$0xff] %v1463
          %1480 = vst [vmem:[#allocation3 + $0x10] sm:$0xff] %v1464
          %1481 = vst [vmem:[#allocation3 + $0x18] sm:$0xff] %v1465
          %1482 = vst [vmem:[#allocation3 + $0x20] sm:$0xff] %v1466
          %1483 = vst [vmem:[#allocation3 + $0x28] sm:$0xff] %v1467
          %1484 = vst [vmem:[#allocation3 + $0x30] sm:$0xff] %v1468
          %1485 = vst [vmem:[#allocation3 + $0x38] sm:$0xff] %v1469
          %1486 = vst [vmem:[#allocation3 + $0x40] sm:$0xff] %v1470
          %1487 = vst [vmem:[#allocation3 + $0x48] sm:$0xff] %v1471
          %1488 = vst [vmem:[#allocation3 + $0x50] sm:$0xff] %v1472
          %1489 = vst [vmem:[#allocation3 + $0x58] sm:$0xff] %v1473
          %1490 = vst [vmem:[#allocation3 + $0x60] sm:$0xff] %v1474
          %1491 = vst [vmem:[#allocation3 + $0x68] sm:$0xff] %v1475
          %1492 = vst [vmem:[#allocation3 + $0x70] sm:$0xff] %v1476
          %1493 = vst [vmem:[#allocation3 + $0x78] sm:$0xff] %v1477
          %v1494 = vpack.c.bf16 %v1117, %v1113
          %v1495 = vpack.c.bf16 %v1127, %v1123
          %v1496 = vpack.c.bf16 %v1137, %v1133
          %v1497 = vpack.c.bf16 %v1147, %v1143
          %v1498 = vpack.c.bf16 %v1157, %v1153
          %v1499 = vpack.c.bf16 %v1167, %v1163
          %v1500 = vpack.c.bf16 %v1177, %v1173
          %v1501 = vpack.c.bf16 %v1187, %v1183
          %v1502 = vpack.c.bf16 %v1197, %v1193
          %v1503 = vpack.c.bf16 %v1207, %v1203
          %v1504 = vpack.c.bf16 %v1217, %v1213
          %v1505 = vpack.c.bf16 %v1227, %v1223
          %v1506 = vpack.c.bf16 %v1237, %v1233
          %v1507 = vpack.c.bf16 %v1247, %v1243
          %v1508 = vpack.c.bf16 %v1257, %v1253
          %v1509 = vpack.c.bf16 %v1267, %v1263
          %1510 = vst [vmem:[#allocation4] sm:$0xff] %v1494
          %1511 = vst [vmem:[#allocation4 + $0x8] sm:$0xff] %v1495
          %1512 = vst [vmem:[#allocation4 + $0x10] sm:$0xff] %v1496
          %1513 = vst [vmem:[#allocation4 + $0x18] sm:$0xff] %v1497
          %1514 = vst [vmem:[#allocation4 + $0x20] sm:$0xff] %v1498
          %1515 = vst [vmem:[#allocation4 + $0x28] sm:$0xff] %v1499
          %1516 = vst [vmem:[#allocation4 + $0x30] sm:$0xff] %v1500
          %1517 = vst [vmem:[#allocation4 + $0x38] sm:$0xff] %v1501
          %1518 = vst [vmem:[#allocation4 + $0x40] sm:$0xff] %v1502
          %1519 = vst [vmem:[#allocation4 + $0x48] sm:$0xff] %v1503
          %1520 = vst [vmem:[#allocation4 + $0x50] sm:$0xff] %v1504
          %1521 = vst [vmem:[#allocation4 + $0x58] sm:$0xff] %v1505
          %1522 = vst [vmem:[#allocation4 + $0x60] sm:$0xff] %v1506
          %1523 = vst [vmem:[#allocation4 + $0x68] sm:$0xff] %v1507
          %1524 = vst [vmem:[#allocation4 + $0x70] sm:$0xff] %v1508
          %1525 = vst [vmem:[#allocation4 + $0x78] sm:$0xff] %v1509
          %v1526 = vpack.c.bf16 %v1307, %v1304
          %v1527 = vpack.c.bf16 %v1315, %v1312
          %v1528 = vpack.c.bf16 %v1323, %v1320
          %v1529 = vpack.c.bf16 %v1331, %v1328
          %v1530 = vpack.c.bf16 %v1339, %v1336
          %v1531 = vpack.c.bf16 %v1347, %v1344
          %v1532 = vpack.c.bf16 %v1355, %v1352
          %v1533 = vpack.c.bf16 %v1363, %v1360
          %v1534 = vpack.c.bf16 %v1371, %v1368
          %v1535 = vpack.c.bf16 %v1379, %v1376
          %v1536 = vpack.c.bf16 %v1387, %v1384
          %v1537 = vpack.c.bf16 %v1395, %v1392
          %v1538 = vpack.c.bf16 %v1403, %v1400
          %v1539 = vpack.c.bf16 %v1411, %v1408
          %v1540 = vpack.c.bf16 %v1419, %v1416
          %v1541 = vpack.c.bf16 %v1427, %v1424
          %1542 = vst [vmem:[#allocation5] sm:$0xff] %v1526
          %1543 = vst [vmem:[#allocation5 + $0x8] sm:$0xff] %v1527
          %1544 = vst [vmem:[#allocation5 + $0x10] sm:$0xff] %v1528
          %1545 = vst [vmem:[#allocation5 + $0x18] sm:$0xff] %v1529
          %1546 = vst [vmem:[#allocation5 + $0x20] sm:$0xff] %v1530
          %1547 = vst [vmem:[#allocation5 + $0x28] sm:$0xff] %v1531
          %1548 = vst [vmem:[#allocation5 + $0x30] sm:$0xff] %v1532
          %1549 = vst [vmem:[#allocation5 + $0x38] sm:$0xff] %v1533
          %1550 = vst [vmem:[#allocation5 + $0x40] sm:$0xff] %v1534
          %1551 = vst [vmem:[#allocation5 + $0x48] sm:$0xff] %v1535
          %1552 = vst [vmem:[#allocation5 + $0x50] sm:$0xff] %v1536
          %1553 = vst [vmem:[#allocation5 + $0x58] sm:$0xff] %v1537
          %1554 = vst [vmem:[#allocation5 + $0x60] sm:$0xff] %v1538
          %1555 = vst [vmem:[#allocation5 + $0x68] sm:$0xff] %v1539
          %1556 = vst [vmem:[#allocation5 + $0x70] sm:$0xff] %v1540
          %1557 = vst [vmem:[#allocation5 + $0x78] sm:$0xff] %v1541
        $region68: #{tpu_custom_call.1} parent=55 // pred_fallthru
          _
        %s1558 = smul.u32 %s32, 128
        %s1559 = sshra.s32 %s1558, 4
        %s1560 = sand.u32 %s1558, 15
        %s1561 = smul.addr %s1559, 8
        %s1562 = scalar_lea.vmem [#allocation3], %s1561
        %v1563 = vld [vmem:[%s1562] sm:$0xff]
        %v1564 = vld [vmem:[%s1562 + $0x8] sm:$0xff]
        %v1565 = vld [vmem:[%s1562 + $0x10] sm:$0xff]
        %v1566 = vld [vmem:[%s1562 + $0x18] sm:$0xff]
        %v1567 = vld [vmem:[%s1562 + $0x20] sm:$0xff]
        %v1568 = vld [vmem:[%s1562 + $0x28] sm:$0xff]
        %v1569 = vld [vmem:[%s1562 + $0x30] sm:$0xff]
        %v1570 = vld [vmem:[%s1562 + $0x38] sm:$0xff]
        %v1571 = vld [vmem:[#allocation4] sm:$0xff]
        %v1572 = vld [vmem:[#allocation4 + $0x8] sm:$0xff]
        %v1573 = vld [vmem:[#allocation4 + $0x10] sm:$0xff]
        %v1574 = vld [vmem:[#allocation4 + $0x18] sm:$0xff]
        %v1575 = vld [vmem:[#allocation4 + $0x20] sm:$0xff]
        %v1576 = vld [vmem:[#allocation4 + $0x28] sm:$0xff]
        %v1577 = vld [vmem:[#allocation4 + $0x30] sm:$0xff]
        %v1578 = vld [vmem:[#allocation4 + $0x38] sm:$0xff]
        %v1579 = vld [vmem:[#allocation4 + $0x40] sm:$0xff]
        %v1580 = vld [vmem:[#allocation4 + $0x48] sm:$0xff]
        %v1581 = vld [vmem:[#allocation4 + $0x50] sm:$0xff]
        %v1582 = vld [vmem:[#allocation4 + $0x58] sm:$0xff]
        %v1583 = vld [vmem:[#allocation4 + $0x60] sm:$0xff]
        %v1584 = vld [vmem:[#allocation4 + $0x68] sm:$0xff]
        %v1585 = vld [vmem:[#allocation4 + $0x70] sm:$0xff]
        %v1586 = vld [vmem:[#allocation4 + $0x78] sm:$0xff]
        %1587 = vmatprep.subr.bf16.mxu0 0
        %1588 = vmatpush1.bf16.xpose.msra.mxu0 %v1571
        %1589 = vmatprep.subr.bf16.mxu0 0
        %1590 = vmatpush1.bf16.xpose.msra.mxu0 %v1572
        %1591 = vmatprep.subr.bf16.mxu0 0
        %1592 = vmatpush1.bf16.xpose.msra.mxu0 %v1573
        %1593 = vmatprep.subr.bf16.mxu0 0
        %1594 = vmatpush1.bf16.xpose.msra.mxu0 %v1574
        %1595 = vmatprep.subr.bf16.mxu0 0
        %1596 = vmatpush1.bf16.xpose.msra.mxu0 %v1575
        %1597 = vmatprep.subr.bf16.mxu0 0
        %1598 = vmatpush1.bf16.xpose.msra.mxu0 %v1576
        %1599 = vmatprep.subr.bf16.mxu0 0
        %1600 = vmatpush1.bf16.xpose.msra.mxu0 %v1577
        %1601 = vmatprep.subr.bf16.mxu0 0
        %1602 = vmatpush1.bf16.xpose.msra.mxu0 %v1578
        %1603 = vmatprep.subr.bf16.mxu0 0
        %1604 = vmatpush1.bf16.xpose.msra.mxu0 %v1579
        %1605 = vmatprep.subr.bf16.mxu0 0
        %1606 = vmatpush1.bf16.xpose.msra.mxu0 %v1580
        %1607 = vmatprep.subr.bf16.mxu0 0
        %1608 = vmatpush1.bf16.xpose.msra.mxu0 %v1581
        %1609 = vmatprep.subr.bf16.mxu0 0
        %1610 = vmatpush1.bf16.xpose.msra.mxu0 %v1582
        %1611 = vmatprep.subr.bf16.mxu0 0
        %1612 = vmatpush1.bf16.xpose.msra.mxu0 %v1583
        %1613 = vmatprep.subr.bf16.mxu0 0
        %1614 = vmatpush1.bf16.xpose.msra.mxu0 %v1584
        %1615 = vmatprep.subr.bf16.mxu0 0
        %1616 = vmatpush1.bf16.xpose.msra.mxu0 %v1585
        %1617 = vmatprep.subr.bf16.mxu0 0
        %1618 = vmatpush1.bf16.xpose.msra.mxu0 %v1586
        %1619 = vmatprep.mubr.bf16.mxu0 0
        %1620 = vmatmul.mubr.bf16.gmra.mrb[0].mxu0 %v1563
        %v1621 = vpop.f32.mrb[0].mxu0
        %v1622 = vadd.f32 0.0, %v1621
        %v1623 = vpop.f32.mrb[0].mxu0
        %v1624 = vadd.f32 0.0, %v1623
        %v1625 = vpop.f32.mrb[0].mxu0
        %v1626 = vadd.f32 0.0, %v1625
        %v1627 = vpop.f32.mrb[0].mxu0
        %v1628 = vadd.f32 0.0, %v1627
        %1629 = vmatprep.mubr.bf16.mxu0 0
        %1630 = vmatmul.mubr.bf16.gmra.mrb[0].mxu0 %v1564
        %v1631 = vpop.f32.mrb[0].mxu0
        %v1632 = vadd.f32 0.0, %v1631
        %v1633 = vpop.f32.mrb[0].mxu0
        %v1634 = vadd.f32 0.0, %v1633
        %v1635 = vpop.f32.mrb[0].mxu0
        %v1636 = vadd.f32 0.0, %v1635
        %v1637 = vpop.f32.mrb[0].mxu0
        %v1638 = vadd.f32 0.0, %v1637
        %1639 = vmatprep.mubr.bf16.mxu0 0
        %1640 = vmatmul.mubr.bf16.gmra.mrb[0].mxu0 %v1565
        %v1641 = vpop.f32.mrb[0].mxu0
        %v1642 = vadd.f32 0.0, %v1641
        %v1643 = vpop.f32.mrb[0].mxu0
        %v1644 = vadd.f32 0.0, %v1643
        %v1645 = vpop.f32.mrb[0].mxu0
        %v1646 = vadd.f32 0.0, %v1645
        %v1647 = vpop.f32.mrb[0].mxu0
        %v1648 = vadd.f32 0.0, %v1647
        %1649 = vmatprep.mubr.bf16.mxu0 0
        %1650 = vmatmul.mubr.bf16.gmra.mrb[0].mxu0 %v1566
        %v1651 = vpop.f32.mrb[0].mxu0
        %v1652 = vadd.f32 0.0, %v1651
        %v1653 = vpop.f32.mrb[0].mxu0
        %v1654 = vadd.f32 0.0, %v1653
        %v1655 = vpop.f32.mrb[0].mxu0
        %v1656 = vadd.f32 0.0, %v1655
        %v1657 = vpop.f32.mrb[0].mxu0
        %v1658 = vadd.f32 0.0, %v1657
        %1659 = vmatprep.mubr.bf16.mxu0 0
        %1660 = vmatmul.mubr.bf16.gmra.mrb[0].mxu0 %v1567
        %v1661 = vpop.f32.mrb[0].mxu0
        %v1662 = vadd.f32 0.0, %v1661
        %v1663 = vpop.f32.mrb[0].mxu0
        %v1664 = vadd.f32 0.0, %v1663
        %v1665 = vpop.f32.mrb[0].mxu0
        %v1666 = vadd.f32 0.0, %v1665
        %v1667 = vpop.f32.mrb[0].mxu0
        %v1668 = vadd.f32 0.0, %v1667
        %1669 = vmatprep.mubr.bf16.mxu0 0
        %1670 = vmatmul.mubr.bf16.gmra.mrb[0].mxu0 %v1568
        %v1671 = vpop.f32.mrb[0].mxu0
        %v1672 = vadd.f32 0.0, %v1671
        %v1673 = vpop.f32.mrb[0].mxu0
        %v1674 = vadd.f32 0.0, %v1673
        %v1675 = vpop.f32.mrb[0].mxu0
        %v1676 = vadd.f32 0.0, %v1675
        %v1677 = vpop.f32.mrb[0].mxu0
        %v1678 = vadd.f32 0.0, %v1677
        %1679 = vmatprep.mubr.bf16.mxu0 0
        %1680 = vmatmul.mubr.bf16.gmra.mrb[0].mxu0 %v1569
        %v1681 = vpop.f32.mrb[0].mxu0
        %v1682 = vadd.f32 0.0, %v1681
        %v1683 = vpop.f32.mrb[0].mxu0
        %v1684 = vadd.f32 0.0, %v1683
        %v1685 = vpop.f32.mrb[0].mxu0
        %v1686 = vadd.f32 0.0, %v1685
        %v1687 = vpop.f32.mrb[0].mxu0
        %v1688 = vadd.f32 0.0, %v1687
        %1689 = vmatprep.mubr.bf16.mxu0 0
        %1690 = vmatmul.mubr.bf16.gmra.mrb[0].mxu0 %v1570
        %v1691 = vpop.f32.mrb[0].mxu0
        %v1692 = vadd.f32 0.0, %v1691
        %v1693 = vpop.f32.mrb[0].mxu0
        %v1694 = vadd.f32 0.0, %v1693
        %v1695 = vpop.f32.mrb[0].mxu0
        %v1696 = vadd.f32 0.0, %v1695
        %v1697 = vpop.f32.mrb[0].mxu0
        %v1698 = vadd.f32 0.0, %v1697
        %1699 = vdwg.mxu0
        %v1700 = vmax.f32 %v1622, %v1624
        %1701 = vmax.xlane.f32.xlu0 %v1700
        %v1702 = vpop.xlane.xlu0 %1701
        %v1703 = vmax.f32 %v1626, %v1628
        %1704 = vmax.xlane.f32.xlu0 %v1703
        %v1705 = vpop.xlane.xlu0 %1704
        %v1706 = vmax.f32 %v1632, %v1634
        %1707 = vmax.xlane.f32.xlu0 %v1706
        %v1708 = vpop.xlane.xlu0 %1707
        %v1709 = vmax.f32 %v1636, %v1638
        %1710 = vmax.xlane.f32.xlu0 %v1709
        %v1711 = vpop.xlane.xlu0 %1710
        %v1712 = vmax.f32 %v1642, %v1644
        %1713 = vmax.xlane.f32.xlu0 %v1712
        %v1714 = vpop.xlane.xlu0 %1713
        %v1715 = vmax.f32 %v1646, %v1648
        %1716 = vmax.xlane.f32.xlu0 %v1715
        %v1717 = vpop.xlane.xlu0 %1716
        %v1718 = vmax.f32 %v1652, %v1654
        %1719 = vmax.xlane.f32.xlu0 %v1718
        %v1720 = vpop.xlane.xlu0 %1719
        %v1721 = vmax.f32 %v1656, %v1658
        %1722 = vmax.xlane.f32.xlu0 %v1721
        %v1723 = vpop.xlane.xlu0 %1722
        %v1724 = vmax.f32 %v1662, %v1664
        %1725 = vmax.xlane.f32.xlu0 %v1724
        %v1726 = vpop.xlane.xlu0 %1725
        %v1727 = vmax.f32 %v1666, %v1668
        %1728 = vmax.xlane.f32.xlu0 %v1727
        %v1729 = vpop.xlane.xlu0 %1728
        %v1730 = vmax.f32 %v1672, %v1674
        %1731 = vmax.xlane.f32.xlu0 %v1730
        %v1732 = vpop.xlane.xlu0 %1731
        %v1733 = vmax.f32 %v1676, %v1678
        %1734 = vmax.xlane.f32.xlu0 %v1733
        %v1735 = vpop.xlane.xlu0 %1734
        %v1736 = vmax.f32 %v1682, %v1684
        %1737 = vmax.xlane.f32.xlu0 %v1736
        %v1738 = vpop.xlane.xlu0 %1737
        %v1739 = vmax.f32 %v1686, %v1688
        %1740 = vmax.xlane.f32.xlu0 %v1739
        %v1741 = vpop.xlane.xlu0 %1740
        %v1742 = vmax.f32 %v1692, %v1694
        %1743 = vmax.xlane.f32.xlu0 %v1742
        %v1744 = vpop.xlane.xlu0 %1743
        %v1745 = vmax.f32 %v1696, %v1698
        %1746 = vmax.xlane.f32.xlu0 %v1745
        %v1747 = vpop.xlane.xlu0 %1746
        %v1748 = vsub.f32 %v1622, %v1702
        %v1749 = vsub.f32 %v1624, %v1702
        %v1750 = vsub.f32 %v1626, %v1705
        %v1751 = vsub.f32 %v1628, %v1705
        %v1752 = vsub.f32 %v1632, %v1708
        %v1753 = vsub.f32 %v1634, %v1708
        %v1754 = vsub.f32 %v1636, %v1711
        %v1755 = vsub.f32 %v1638, %v1711
        %v1756 = vsub.f32 %v1642, %v1714
        %v1757 = vsub.f32 %v1644, %v1714
        %v1758 = vsub.f32 %v1646, %v1717
        %v1759 = vsub.f32 %v1648, %v1717
        %v1760 = vsub.f32 %v1652, %v1720
        %v1761 = vsub.f32 %v1654, %v1720
        %v1762 = vsub.f32 %v1656, %v1723
        %v1763 = vsub.f32 %v1658, %v1723
        %v1764 = vsub.f32 %v1662, %v1726
        %v1765 = vsub.f32 %v1664, %v1726
        %v1766 = vsub.f32 %v1666, %v1729
        %v1767 = vsub.f32 %v1668, %v1729
        %v1768 = vsub.f32 %v1672, %v1732
        %v1769 = vsub.f32 %v1674, %v1732
        %v1770 = vsub.f32 %v1676, %v1735
        %v1771 = vsub.f32 %v1678, %v1735
        %v1772 = vsub.f32 %v1682, %v1738
        %v1773 = vsub.f32 %v1684, %v1738
        %v1774 = vsub.f32 %v1686, %v1741
        %v1775 = vsub.f32 %v1688, %v1741
        %v1776 = vsub.f32 %v1692, %v1744
        %v1777 = vsub.f32 %v1694, %v1744
        %v1778 = vsub.f32 %v1696, %v1747
        %v1779 = vsub.f32 %v1698, %v1747
        %v1780 = vmul.f32 %v1748, 1.442695
        %v1781 = vpow.pop %v1780
        %v1782 = vmul.f32 %v1749, 1.442695
        %v1783 = vpow.pop %v1782
        %v1784 = vmul.f32 %v1750, 1.442695
        %v1785 = vpow.pop %v1784
        %v1786 = vmul.f32 %v1751, 1.442695
        %v1787 = vpow.pop %v1786
        %v1788 = vmul.f32 %v1752, 1.442695
        %v1789 = vpow.pop %v1788
        %v1790 = vmul.f32 %v1753, 1.442695
        %v1791 = vpow.pop %v1790
        %v1792 = vmul.f32 %v1754, 1.442695
        %v1793 = vpow.pop %v1792
        %v1794 = vmul.f32 %v1755, 1.442695
        %v1795 = vpow.pop %v1794
        %v1796 = vmul.f32 %v1756, 1.442695
        %v1797 = vpow.pop %v1796
        %v1798 = vmul.f32 %v1757, 1.442695
        %v1799 = vpow.pop %v1798
        %v1800 = vmul.f32 %v1758, 1.442695
        %v1801 = vpow.pop %v1800
        %v1802 = vmul.f32 %v1759, 1.442695
        %v1803 = vpow.pop %v1802
        %v1804 = vmul.f32 %v1760, 1.442695
        %v1805 = vpow.pop %v1804
        %v1806 = vmul.f32 %v1761, 1.442695
        %v1807 = vpow.pop %v1806
        %v1808 = vmul.f32 %v1762, 1.442695
        %v1809 = vpow.pop %v1808
        %v1810 = vmul.f32 %v1763, 1.442695
        %v1811 = vpow.pop %v1810
        %v1812 = vmul.f32 %v1764, 1.442695
        %v1813 = vpow.pop %v1812
        %v1814 = vmul.f32 %v1765, 1.442695
        %v1815 = vpow.pop %v1814
        %v1816 = vmul.f32 %v1766, 1.442695
        %v1817 = vpow.pop %v1816
        %v1818 = vmul.f32 %v1767, 1.442695
        %v1819 = vpow.pop %v1818
        %v1820 = vmul.f32 %v1768, 1.442695
        %v1821 = vpow.pop %v1820
        %v1822 = vmul.f32 %v1769, 1.442695
        %v1823 = vpow.pop %v1822
        %v1824 = vmul.f32 %v1770, 1.442695
        %v1825 = vpow.pop %v1824
        %v1826 = vmul.f32 %v1771, 1.442695
        %v1827 = vpow.pop %v1826
        %v1828 = vmul.f32 %v1772, 1.442695
        %v1829 = vpow.pop %v1828
        %v1830 = vmul.f32 %v1773, 1.442695
        %v1831 = vpow.pop %v1830
        %v1832 = vmul.f32 %v1774, 1.442695
        %v1833 = vpow.pop %v1832
        %v1834 = vmul.f32 %v1775, 1.442695
        %v1835 = vpow.pop %v1834
        %v1836 = vmul.f32 %v1776, 1.442695
        %v1837 = vpow.pop %v1836
        %v1838 = vmul.f32 %v1777, 1.442695
        %v1839 = vpow.pop %v1838
        %v1840 = vmul.f32 %v1778, 1.442695
        %v1841 = vpow.pop %v1840
        %v1842 = vmul.f32 %v1779, 1.442695
        %v1843 = vpow.pop %v1842
        %v1844 = vadd.f32 %v1781, %v1783
        %1845 = vadd.xlane.f32.xlu0 %v1844
        %v1846 = vpop.xlane.xlu0 %1845
        %v1847 = vadd.f32 %v1785, %v1787
        %1848 = vadd.xlane.f32.xlu0 %v1847
        %v1849 = vpop.xlane.xlu0 %1848
        %v1850 = vadd.f32 %v1789, %v1791
        %1851 = vadd.xlane.f32.xlu0 %v1850
        %v1852 = vpop.xlane.xlu0 %1851
        %v1853 = vadd.f32 %v1793, %v1795
        %1854 = vadd.xlane.f32.xlu0 %v1853
        %v1855 = vpop.xlane.xlu0 %1854
        %v1856 = vadd.f32 %v1797, %v1799
        %1857 = vadd.xlane.f32.xlu0 %v1856
        %v1858 = vpop.xlane.xlu0 %1857
        %v1859 = vadd.f32 %v1801, %v1803
        %1860 = vadd.xlane.f32.xlu0 %v1859
        %v1861 = vpop.xlane.xlu0 %1860
        %v1862 = vadd.f32 %v1805, %v1807
        %1863 = vadd.xlane.f32.xlu0 %v1862
        %v1864 = vpop.xlane.xlu0 %1863
        %v1865 = vadd.f32 %v1809, %v1811
        %1866 = vadd.xlane.f32.xlu0 %v1865
        %v1867 = vpop.xlane.xlu0 %1866
        %v1868 = vadd.f32 %v1813, %v1815
        %1869 = vadd.xlane.f32.xlu0 %v1868
        %v1870 = vpop.xlane.xlu0 %1869
        %v1871 = vadd.f32 %v1817, %v1819
        %1872 = vadd.xlane.f32.xlu0 %v1871
        %v1873 = vpop.xlane.xlu0 %1872
        %v1874 = vadd.f32 %v1821, %v1823
        %1875 = vadd.xlane.f32.xlu0 %v1874
        %v1876 = vpop.xlane.xlu0 %1875
        %v1877 = vadd.f32 %v1825, %v1827
        %1878 = vadd.xlane.f32.xlu0 %v1877
        %v1879 = vpop.xlane.xlu0 %1878
        %v1880 = vadd.f32 %v1829, %v1831
        %1881 = vadd.xlane.f32.xlu0 %v1880
        %v1882 = vpop.xlane.xlu0 %1881
        %v1883 = vadd.f32 %v1833, %v1835
        %1884 = vadd.xlane.f32.xlu0 %v1883
        %v1885 = vpop.xlane.xlu0 %1884
        %v1886 = vadd.f32 %v1837, %v1839
        %1887 = vadd.xlane.f32.xlu0 %v1886
        %v1888 = vpop.xlane.xlu0 %1887
        %v1889 = vadd.f32 %v1841, %v1843
        %1890 = vadd.xlane.f32.xlu0 %v1889
        %v1891 = vpop.xlane.xlu0 %1890
        %v1892 = vpack.c.bf16 %v1785, %v1781
        %v1893 = vpack.c.bf16 %v1787, %v1783
        %v1894 = vpack.c.bf16 %v1793, %v1789
        %v1895 = vpack.c.bf16 %v1795, %v1791
        %v1896 = vpack.c.bf16 %v1801, %v1797
        %v1897 = vpack.c.bf16 %v1803, %v1799
        %v1898 = vpack.c.bf16 %v1809, %v1805
        %v1899 = vpack.c.bf16 %v1811, %v1807
        %v1900 = vpack.c.bf16 %v1817, %v1813
        %v1901 = vpack.c.bf16 %v1819, %v1815
        %v1902 = vpack.c.bf16 %v1825, %v1821
        %v1903 = vpack.c.bf16 %v1827, %v1823
        %v1904 = vpack.c.bf16 %v1833, %v1829
        %v1905 = vpack.c.bf16 %v1835, %v1831
        %v1906 = vpack.c.bf16 %v1841, %v1837
        %v1907 = vpack.c.bf16 %v1843, %v1839
        %v1908 = vld [vmem:[#allocation5] sm:$0xff]
        %v1909 = vld [vmem:[#allocation5 + $0x8] sm:$0xff]
        %v1910 = vld [vmem:[#allocation5 + $0x10] sm:$0xff]
        %v1911 = vld [vmem:[#allocation5 + $0x18] sm:$0xff]
        %v1912 = vld [vmem:[#allocation5 + $0x20] sm:$0xff]
        %v1913 = vld [vmem:[#allocation5 + $0x28] sm:$0xff]
        %v1914 = vld [vmem:[#allocation5 + $0x30] sm:$0xff]
        %v1915 = vld [vmem:[#allocation5 + $0x38] sm:$0xff]
        %v1916 = vld [vmem:[#allocation5 + $0x40] sm:$0xff]
        %v1917 = vld [vmem:[#allocation5 + $0x48] sm:$0xff]
        %v1918 = vld [vmem:[#allocation5 + $0x50] sm:$0xff]
        %v1919 = vld [vmem:[#allocation5 + $0x58] sm:$0xff]
        %v1920 = vld [vmem:[#allocation5 + $0x60] sm:$0xff]
        %v1921 = vld [vmem:[#allocation5 + $0x68] sm:$0xff]
        %v1922 = vld [vmem:[#allocation5 + $0x70] sm:$0xff]
        %v1923 = vld [vmem:[#allocation5 + $0x78] sm:$0xff]
        %1924 = vmatprep.subr.bf16.mxu0 0
        %1925 = vmatpush1.bf16.msra.mxu0 %v1908
        %1926 = vmatprep.subr.bf16.mxu0 0
        %1927 = vmatpush1.bf16.msra.mxu0 %v1909
        %1928 = vmatprep.subr.bf16.mxu0 0
        %1929 = vmatpush1.bf16.msra.mxu0 %v1910
        %1930 = vmatprep.subr.bf16.mxu0 0
        %1931 = vmatpush1.bf16.msra.mxu0 %v1911
        %1932 = vmatprep.subr.bf16.mxu0 0
        %1933 = vmatpush1.bf16.msra.mxu0 %v1912
        %1934 = vmatprep.subr.bf16.mxu0 0
        %1935 = vmatpush1.bf16.msra.mxu0 %v1913
        %1936 = vmatprep.subr.bf16.mxu0 0
        %1937 = vmatpush1.bf16.msra.mxu0 %v1914
        %1938 = vmatprep.subr.bf16.mxu0 0
        %1939 = vmatpush1.bf16.msra.mxu0 %v1915
        %1940 = vmatprep.subr.bf16.mxu0 0
        %1941 = vmatpush1.bf16.msra.mxu0 %v1916
        %1942 = vmatprep.subr.bf16.mxu0 0
        %1943 = vmatpush1.bf16.msra.mxu0 %v1917
        %1944 = vmatprep.subr.bf16.mxu0 0
        %1945 = vmatpush1.bf16.msra.mxu0 %v1918
        %1946 = vmatprep.subr.bf16.mxu0 0
        %1947 = vmatpush1.bf16.msra.mxu0 %v1919
        %1948 = vmatprep.subr.bf16.mxu0 0
        %1949 = vmatpush1.bf16.msra.mxu0 %v1920
        %1950 = vmatprep.subr.bf16.mxu0 0
        %1951 = vmatpush1.bf16.msra.mxu0 %v1921
        %1952 = vmatprep.subr.bf16.mxu0 0
        %1953 = vmatpush1.bf16.msra.mxu0 %v1922
        %1954 = vmatprep.subr.bf16.mxu0 0
        %1955 = vmatpush1.bf16.msra.mxu0 %v1923
        %1956 = vmatprep.mubr.bf16.mxu0 %v1893
        %1957 = vmatmul.mubr.bf16.gmra.mrb[0].mxu0 %v1892
        %v1958 = vpop.f32.mrb[0].mxu0
        %v1959 = vadd.f32 0.0, %v1958
        %v1960 = vpop.f32.mrb[0].mxu0
        %v1961 = vpop.f32.mrb[0].mxu0
        %v1962 = vadd.f32 0.0, %v1961
        %v1963 = vpop.f32.mrb[0].mxu0
        %1964 = vmatprep.mubr.bf16.mxu0 %v1895
        %1965 = vmatmul.mubr.bf16.gmra.mrb[0].mxu0 %v1894
        %v1966 = vpop.f32.mrb[0].mxu0
        %v1967 = vadd.f32 0.0, %v1966
        %v1968 = vpop.f32.mrb[0].mxu0
        %v1969 = vpop.f32.mrb[0].mxu0
        %v1970 = vadd.f32 0.0, %v1969
        %v1971 = vpop.f32.mrb[0].mxu0
        %1972 = vmatprep.mubr.bf16.mxu0 %v1897
        %1973 = vmatmul.mubr.bf16.gmra.mrb[0].mxu0 %v1896
        %v1974 = vpop.f32.mrb[0].mxu0
        %v1975 = vadd.f32 0.0, %v1974
        %v1976 = vpop.f32.mrb[0].mxu0
        %v1977 = vpop.f32.mrb[0].mxu0
        %v1978 = vadd.f32 0.0, %v1977
        %v1979 = vpop.f32.mrb[0].mxu0
        %1980 = vmatprep.mubr.bf16.mxu0 %v1899
        %1981 = vmatmul.mubr.bf16.gmra.mrb[0].mxu0 %v1898
        %v1982 = vpop.f32.mrb[0].mxu0
        %v1983 = vadd.f32 0.0, %v1982
        %v1984 = vpop.f32.mrb[0].mxu0
        %v1985 = vpop.f32.mrb[0].mxu0
        %v1986 = vadd.f32 0.0, %v1985
        %v1987 = vpop.f32.mrb[0].mxu0
        %1988 = vmatprep.mubr.bf16.mxu0 %v1901
        %1989 = vmatmul.mubr.bf16.gmra.mrb[0].mxu0 %v1900
        %v1990 = vpop.f32.mrb[0].mxu0
        %v1991 = vadd.f32 0.0, %v1990
        %v1992 = vpop.f32.mrb[0].mxu0
        %v1993 = vpop.f32.mrb[0].mxu0
        %v1994 = vadd.f32 0.0, %v1993
        %v1995 = vpop.f32.mrb[0].mxu0
        %1996 = vmatprep.mubr.bf16.mxu0 %v1903
        %1997 = vmatmul.mubr.bf16.gmra.mrb[0].mxu0 %v1902
        %v1998 = vpop.f32.mrb[0].mxu0
        %v1999 = vadd.f32 0.0, %v1998
        %v2000 = vpop.f32.mrb[0].mxu0
        %v2001 = vpop.f32.mrb[0].mxu0
        %v2002 = vadd.f32 0.0, %v2001
        %v2003 = vpop.f32.mrb[0].mxu0
        %2004 = vmatprep.mubr.bf16.mxu0 %v1905
        %2005 = vmatmul.mubr.bf16.gmra.mrb[0].mxu0 %v1904
        %v2006 = vpop.f32.mrb[0].mxu0
        %v2007 = vadd.f32 0.0, %v2006
        %v2008 = vpop.f32.mrb[0].mxu0
        %v2009 = vpop.f32.mrb[0].mxu0
        %v2010 = vadd.f32 0.0, %v2009
        %v2011 = vpop.f32.mrb[0].mxu0
        %2012 = vmatprep.mubr.bf16.mxu0 %v1907
        %2013 = vmatmul.mubr.bf16.gmra.mrb[0].mxu0 %v1906
        %v2014 = vpop.f32.mrb[0].mxu0
        %v2015 = vadd.f32 0.0, %v2014
        %v2016 = vpop.f32.mrb[0].mxu0
        %v2017 = vpop.f32.mrb[0].mxu0
        %v2018 = vadd.f32 0.0, %v2017
        %v2019 = vpop.f32.mrb[0].mxu0
        %2020 = vdwg.mxu0
        %v2021 = vrcp.pop %v1846
        %v2022 = vrcp.pop %v1849
        %v2023 = vrcp.pop %v1852
        %v2024 = vrcp.pop %v1855
        %v2025 = vrcp.pop %v1858
        %v2026 = vrcp.pop %v1861
        %v2027 = vrcp.pop %v1864
        %v2028 = vrcp.pop %v1867
        %v2029 = vrcp.pop %v1870
        %v2030 = vrcp.pop %v1873
        %v2031 = vrcp.pop %v1876
        %v2032 = vrcp.pop %v1879
        %v2033 = vrcp.pop %v1882
        %v2034 = vrcp.pop %v1885
        %v2035 = vrcp.pop %v1888
        %v2036 = vrcp.pop %v1891
        %v2037 = vmul.f32 %v1959, %v2021
        %v2038 = vmul.f32 %v1962, %v2022
        %v2039 = vmul.f32 %v1967, %v2023
        %v2040 = vmul.f32 %v1970, %v2024
        %v2041 = vmul.f32 %v1975, %v2025
        %v2042 = vmul.f32 %v1978, %v2026
        %v2043 = vmul.f32 %v1983, %v2027
        %v2044 = vmul.f32 %v1986, %v2028
        %v2045 = vmul.f32 %v1991, %v2029
        %v2046 = vmul.f32 %v1994, %v2030
        %v2047 = vmul.f32 %v1999, %v2031
        %v2048 = vmul.f32 %v2002, %v2032
        %v2049 = vmul.f32 %v2007, %v2033
        %v2050 = vmul.f32 %v2010, %v2034
        %v2051 = vmul.f32 %v2015, %v2035
        %v2052 = vmul.f32 %v2018, %v2036
        %v2053 = vpack.c.bf16 %v2038, %v2037
        %v2054 = vpack.c.bf16 %v2040, %v2039
        %v2055 = vpack.c.bf16 %v2042, %v2041
        %v2056 = vpack.c.bf16 %v2044, %v2043
        %v2057 = vpack.c.bf16 %v2046, %v2045
        %v2058 = vpack.c.bf16 %v2048, %v2047
        %v2059 = vpack.c.bf16 %v2050, %v2049
        %v2060 = vpack.c.bf16 %v2052, %v2051
        %v2061 = vld [vmem:[%s7] sm:$0xf]
        %v2062 = vld [vmem:[%s7 + $0x4] sm:$0xf]
        %v2063 = vld [vmem:[%s7 + $0x8] sm:$0xf]
        %v2064 = vld [vmem:[%s7 + $0xc] sm:$0xf]
        %v2065 = vld [vmem:[%s7 + $0x10] sm:$0xf]
        %v2066 = vld [vmem:[%s7 + $0x14] sm:$0xf]
        %v2067 = vld [vmem:[%s7 + $0x18] sm:$0xf]
        %v2068 = vld [vmem:[%s7 + $0x1c] sm:$0xf]
        %v2069 = vld [vmem:[%s7 + $0x20] sm:$0xf]
        %v2070 = vld [vmem:[%s7 + $0x24] sm:$0xf]
        %v2071 = vld [vmem:[%s7 + $0x28] sm:$0xf]
        %v2072 = vld [vmem:[%s7 + $0x2c] sm:$0xf]
        %v2073 = vld [vmem:[%s7 + $0x30] sm:$0xf]
        %v2074 = vld [vmem:[%s7 + $0x34] sm:$0xf]
        %v2075 = vld [vmem:[%s7 + $0x38] sm:$0xf]
        %v2076 = vld [vmem:[%s7 + $0x3c] sm:$0xf]
        %v2077 = vld [vmem:[%s8] sm:$0x1]
        %v2079 = vlaneseq
        %v2080 = vshrl.u32 %v2079, 7
        %v2081 = vsub.s32 0, %v2080
        %v2082 = vrot.slane %v2077, %v2081
        %v2100 = vunpack.c.l.b16 %v2061
        %v2101 = vunpack.c.l.b16 %v2062
        %v2102 = vunpack.c.l.b16 %v2063
        %v2103 = vunpack.c.l.b16 %v2064
        %v2104 = vunpack.c.l.b16 %v2065
        %v2105 = vunpack.c.l.b16 %v2066
        %v2106 = vunpack.c.l.b16 %v2067
        %v2107 = vunpack.c.l.b16 %v2068
        %v2108 = vunpack.c.l.b16 %v2069
        %v2109 = vunpack.c.l.b16 %v2070
        %v2110 = vunpack.c.l.b16 %v2071
        %v2111 = vunpack.c.l.b16 %v2072
        %v2112 = vunpack.c.l.b16 %v2073
        %v2113 = vunpack.c.l.b16 %v2074
        %v2114 = vunpack.c.l.b16 %v2075
        %v2115 = vunpack.c.l.b16 %v2076
        %v2116 = vpack.c.b16 %v2101, %v2100
        %v2117 = vpack.c.b16 %v2103, %v2102
        %v2118 = vpack.c.b16 %v2105, %v2104
        %v2119 = vpack.c.b16 %v2107, %v2106
        %v2120 = vpack.c.b16 %v2109, %v2108
        %v2121 = vpack.c.b16 %v2111, %v2110
        %v2122 = vpack.c.b16 %v2113, %v2112
        %v2123 = vpack.c.b16 %v2115, %v2114
        %2132 = vmatprep.subr.bf16.mxu0 0
        %2133 = vmatpush1.bf16.msra.mxu0 %v2116
        %2134 = vmatprep.subr.bf16.mxu0 0
        %2135 = vmatpush1.bf16.msra.mxu0 %v2117
        %2136 = vmatprep.subr.bf16.mxu0 0
        %2137 = vmatpush1.bf16.msra.mxu0 %v2118
        %2138 = vmatprep.subr.bf16.mxu0 0
        %2139 = vmatpush1.bf16.msra.mxu0 %v2119
        %2140 = vmatprep.subr.bf16.mxu0 0
        %2141 = vmatpush1.bf16.msra.mxu0 %v2120
        %2142 = vmatprep.subr.bf16.mxu0 0
        %2143 = vmatpush1.bf16.msra.mxu0 %v2121
        %2144 = vmatprep.subr.bf16.mxu0 0
        %2145 = vmatpush1.bf16.msra.mxu0 %v2122
        %2146 = vmatprep.subr.bf16.mxu0 0
        %2147 = vmatpush1.bf16.msra.mxu0 %v2123
        %2148 = vmatprep.subr.bf16.mxu0 0
        %2149 = vmatpush1.bf16.msra.mxu0 0
        %2150 = vmatprep.subr.bf16.mxu0 0
        %2151 = vmatpush1.bf16.msra.mxu0 0
        %2152 = vmatprep.subr.bf16.mxu0 0
        %2153 = vmatpush1.bf16.msra.mxu0 0
        %2154 = vmatprep.subr.bf16.mxu0 0
        %2155 = vmatpush1.bf16.msra.mxu0 0
        %2156 = vmatprep.subr.bf16.mxu0 0
        %2157 = vmatpush1.bf16.msra.mxu0 0
        %2158 = vmatprep.subr.bf16.mxu0 0
        %2159 = vmatpush1.bf16.msra.mxu0 0
        %2160 = vmatprep.subr.bf16.mxu0 0
        %2161 = vmatpush1.bf16.msra.mxu0 0
        %2162 = vmatprep.subr.bf16.mxu0 0
        %2163 = vmatpush1.bf16.msra.mxu0 0
        %2164 = vmatprep.mubr.bf16.mxu0 0
        %2165 = vmatmul.mubr.bf16.gmra.mrb[0].mxu0 %v2053
        %v2166 = vpop.f32.mrb[0].mxu0
        %v2167 = vadd.f32 %v2082, %v2166
        %v2168 = vpop.f32.mrb[0].mxu0
        %v2169 = vpop.f32.mrb[0].mxu0
        %v2170 = vadd.f32 %v2082, %v2169
        %v2171 = vpop.f32.mrb[0].mxu0
        %2172 = vmatprep.mubr.bf16.mxu0 0
        %2173 = vmatmul.mubr.bf16.gmra.mrb[0].mxu0 %v2054
        %v2174 = vpop.f32.mrb[0].mxu0
        %v2175 = vadd.f32 %v2082, %v2174
        %v2176 = vpop.f32.mrb[0].mxu0
        %v2177 = vpop.f32.mrb[0].mxu0
        %v2178 = vadd.f32 %v2082, %v2177
        %v2179 = vpop.f32.mrb[0].mxu0
        %2180 = vmatprep.mubr.bf16.mxu0 0
        %2181 = vmatmul.mubr.bf16.gmra.mrb[0].mxu0 %v2055
        %v2182 = vpop.f32.mrb[0].mxu0
        %v2183 = vadd.f32 %v2082, %v2182
        %v2184 = vpop.f32.mrb[0].mxu0
        %v2185 = vpop.f32.mrb[0].mxu0
        %v2186 = vadd.f32 %v2082, %v2185
        %v2187 = vpop.f32.mrb[0].mxu0
        %2188 = vmatprep.mubr.bf16.mxu0 0
        %2189 = vmatmul.mubr.bf16.gmra.mrb[0].mxu0 %v2056
        %v2190 = vpop.f32.mrb[0].mxu0
        %v2191 = vadd.f32 %v2082, %v2190
        %v2192 = vpop.f32.mrb[0].mxu0
        %v2193 = vpop.f32.mrb[0].mxu0
        %v2194 = vadd.f32 %v2082, %v2193
        %v2195 = vpop.f32.mrb[0].mxu0
        %2196 = vmatprep.mubr.bf16.mxu0 0
        %2197 = vmatmul.mubr.bf16.gmra.mrb[0].mxu0 %v2057
        %v2198 = vpop.f32.mrb[0].mxu0
        %v2199 = vadd.f32 %v2082, %v2198
        %v2200 = vpop.f32.mrb[0].mxu0
        %v2201 = vpop.f32.mrb[0].mxu0
        %v2202 = vadd.f32 %v2082, %v2201
        %v2203 = vpop.f32.mrb[0].mxu0
        %2204 = vmatprep.mubr.bf16.mxu0 0
        %2205 = vmatmul.mubr.bf16.gmra.mrb[0].mxu0 %v2058
        %v2206 = vpop.f32.mrb[0].mxu0
        %v2207 = vadd.f32 %v2082, %v2206
        %v2208 = vpop.f32.mrb[0].mxu0
        %v2209 = vpop.f32.mrb[0].mxu0
        %v2210 = vadd.f32 %v2082, %v2209
        %v2211 = vpop.f32.mrb[0].mxu0
        %2212 = vmatprep.mubr.bf16.mxu0 0
        %2213 = vmatmul.mubr.bf16.gmra.mrb[0].mxu0 %v2059
        %v2214 = vpop.f32.mrb[0].mxu0
        %v2215 = vadd.f32 %v2082, %v2214
        %v2216 = vpop.f32.mrb[0].mxu0
        %v2217 = vpop.f32.mrb[0].mxu0
        %v2218 = vadd.f32 %v2082, %v2217
        %v2219 = vpop.f32.mrb[0].mxu0
        %2220 = vmatprep.mubr.bf16.mxu0 0
        %2221 = vmatmul.mubr.bf16.gmra.mrb[0].mxu0 %v2060
        %v2222 = vpop.f32.mrb[0].mxu0
        %v2223 = vadd.f32 %v2082, %v2222
        %v2224 = vpop.f32.mrb[0].mxu0
        %v2225 = vpop.f32.mrb[0].mxu0
        %v2226 = vadd.f32 %v2082, %v2225
        %v2227 = vpop.f32.mrb[0].mxu0
        %2228 = vdwg.mxu0
        %s2229 = scalar_lea.vmem [#allocation2], %s1558
        %v2230 = vld [vmem:[%s2229] sm:$0xff]
        %v2231 = vld [vmem:[%s2229 + $0x8] sm:$0xff]
        %v2232 = vld [vmem:[%s2229 + $0x10] sm:$0xff]
        %v2233 = vld [vmem:[%s2229 + $0x18] sm:$0xff]
        %v2234 = vld [vmem:[%s2229 + $0x20] sm:$0xff]
        %v2235 = vld [vmem:[%s2229 + $0x28] sm:$0xff]
        %v2236 = vld [vmem:[%s2229 + $0x30] sm:$0xff]
        %v2237 = vld [vmem:[%s2229 + $0x38] sm:$0xff]
        %v2238 = vld [vmem:[%s2229 + $0x40] sm:$0xff]
        %v2239 = vld [vmem:[%s2229 + $0x48] sm:$0xff]
        %v2240 = vld [vmem:[%s2229 + $0x50] sm:$0xff]
        %v2241 = vld [vmem:[%s2229 + $0x58] sm:$0xff]
        %v2242 = vld [vmem:[%s2229 + $0x60] sm:$0xff]
        %v2243 = vld [vmem:[%s2229 + $0x68] sm:$0xff]
        %v2244 = vld [vmem:[%s2229 + $0x70] sm:$0xff]
        %v2245 = vld [vmem:[%s2229 + $0x78] sm:$0xff]
        %v2246 = vadd.f32 %v2230, %v2167
        %v2247 = vadd.f32 %v2231, %v2170
        %v2248 = vadd.f32 %v2232, %v2175
        %v2249 = vadd.f32 %v2233, %v2178
        %v2250 = vadd.f32 %v2234, %v2183
        %v2251 = vadd.f32 %v2235, %v2186
        %v2252 = vadd.f32 %v2236, %v2191
        %v2253 = vadd.f32 %v2237, %v2194
        %v2254 = vadd.f32 %v2238, %v2199
        %v2255 = vadd.f32 %v2239, %v2202
        %v2256 = vadd.f32 %v2240, %v2207
        %v2257 = vadd.f32 %v2241, %v2210
        %v2258 = vadd.f32 %v2242, %v2215
        %v2259 = vadd.f32 %v2243, %v2218
        %v2260 = vadd.f32 %v2244, %v2223
        %v2261 = vadd.f32 %v2245, %v2226
        %2262 = vst [vmem:[%s379] sm:$0xff] %v2246
        %2263 = vst [vmem:[%s379 + $0x8] sm:$0xff] %v2247
        %2264 = vst [vmem:[%s379 + $0x10] sm:$0xff] %v2248
        %2265 = vst [vmem:[%s379 + $0x18] sm:$0xff] %v2249
        %2266 = vst [vmem:[%s379 + $0x20] sm:$0xff] %v2250
        %2267 = vst [vmem:[%s379 + $0x28] sm:$0xff] %v2251
        %2268 = vst [vmem:[%s379 + $0x30] sm:$0xff] %v2252
        %2269 = vst [vmem:[%s379 + $0x38] sm:$0xff] %v2253
        %2270 = vst [vmem:[%s379 + $0x40] sm:$0xff] %v2254
        %2271 = vst [vmem:[%s379 + $0x48] sm:$0xff] %v2255
        %2272 = vst [vmem:[%s379 + $0x50] sm:$0xff] %v2256
        %2273 = vst [vmem:[%s379 + $0x58] sm:$0xff] %v2257
        %2274 = vst [vmem:[%s379 + $0x60] sm:$0xff] %v2258
        %2275 = vst [vmem:[%s379 + $0x68] sm:$0xff] %v2259
        %2276 = vst [vmem:[%s379 + $0x70] sm:$0xff] %v2260
        %2277 = vst [vmem:[%s379 + $0x78] sm:$0xff] %v2261
        %s2278 = sand.u32 %s243, 1
        %s2279 = scalar_lea.sflag [#allocation8], %s2278
        %s2280 = sand.u32 %s243, 1
        %s2281 = smul.addr %s2280, 128
        %s2282 = scalar_lea.vmem [#allocation11], %s2281
        // Predicated region
        $region69: #{tpu_custom_call.1} parent=55 // pred_check
          %p2283 = pneg %p253
        $region70: #{tpu_custom_call.1} parent=55 // pred_check_branch
          %2285 = sbr.rel (%p2283) target = $region72
        $region71: #{tpu_custom_call.1} parent=55 // pred_region
          %s2286 = smul.u32 16, %s32
          %s2288 = ssub.s32 2048, 2048
          %2289 = vsyncadd %s2279, %s2288
          %s2290 = smul.addr %s31, 32
          %s2291 = sadd.s32 %s2286, %s2290
          %s2292 = smul.addr %s2291, 128
          %s2293 = scalar_lea.hbm %s9, %s2292
          %s2294 = sshll.u32 %s2282, 4
          %s2295 = int_to_ptr.vmem [resolvable:$true] %s2294
          %2300 = dma.vmem_to_hbm [thread:$0]  %s2295, 2048, %s2293, %s2279, 128, 128, 8
        $region72: #{tpu_custom_call.1} parent=55 // pred_fallthru
          _
      $region56: #{tpu_custom_call.1} parent=5 // pred_fallthru
        _
      %p2301 = scmp.le.s32.totalorder 2, %s22
      // Predicated region
      $region73: #{tpu_custom_call.1} parent=5 // pred_check
        %p2302 = pneg %p2301
      $region74: #{tpu_custom_call.1} parent=5 // pred_check_branch
        %2304 = sbr.rel (%p2302) target = $region76
      $region75: #{tpu_custom_call.1} parent=5 // pred_region
        %s2305 = ssub.s32 %s22, 2
        // Predicated region
        $region77: #{tpu_custom_call.1} parent=75 // pred_check
          %p2306 = pneg %p259
        $region78: #{tpu_custom_call.1} parent=75 // pred_check_branch
          %2308 = sbr.rel (%p2306) target = $region80
        $region79: #{tpu_custom_call.1} parent=75 // pred_region
          %s2309 = sand.u32 %s244, 1
          %s2310 = scalar_lea.sflag [#allocation8], %s2309
          %s2311 = sand.u32 %s244, 1
          %s2312 = smul.addr %s2311, 128
          %s2313 = scalar_lea.vmem [#allocation11], %s2312
          %2314 = dma.done %s2310, 2048
        $region80: #{tpu_custom_call.1} parent=75 // pred_fallthru
          _
      $region76: #{tpu_custom_call.1} parent=5 // pred_fallthru
        _
    $region6: #{tpu_custom_call.1} parent=1 // loop_footer
      %s26 = sadd.s32 1, %s22
    $region7: #{tpu_custom_call.1} parent=1 // loop_footer_branch
      %21 = sbr.rel target = $region3
    $region8: #{tpu_custom_call.1} parent=1 // loop_exit
      _
    %2315 = vsyncpa [#allocation7], 1
    %s2316 = scalar_lea.sflag [#allocation7], 1
    %2317 = vsyncpa %s2316, 1
    %2318 = vsyncpa [#allocation10], 1
    %2319 = vsyncpa [#allocation8], 1
    %s2320 = scalar_lea.sflag [#allocation8], 1
    %2321 = vsyncpa %s2320, 1

</llo_original>
